<compile_context>
chip_gen: v7x
topology: tpu7x:2x2x1
jax: 0.10.0
libtpu: 0.0.40
codegen_flags: <defaults>
</compile_context>

<pallas_src>
import jax
import jax.numpy as jnp
from jax.experimental import pallas as pl
from jax.experimental.pallas import tpu as pltpu

LATENT_DIM = 50
HIDDEN = 500
OUT = 28 * 28  # 784

# Hardware-friendly padded sizes (lane = 128, sublane = 8).
LATENT_PAD = 64    # zero rows of W1 keep the math exact
HIDDEN_PAD = 512   # 500 -> 512 (multiple of 128)
# NOTE: the output/N dimension is intentionally NOT padded (784 columns are
# stored directly; block last-dim == full array dim is legal).


def _round_up(x, m):
    return (x + m - 1) // m * m


def decoder_kernel(x_ref, w1_ref, b1_ref, w2_ref, b2_ref, o_ref):
    # (TB, L) bf16 @ (L, H) bf16 -> f32 accumulation on the MXU.
    h = jnp.dot(x_ref[...], w1_ref[...], preferred_element_type=jnp.float32)
    h = jnp.maximum(h + b1_ref[...], 0.0)               # bias + ReLU in f32 (VPU)
    y = jnp.dot(h.astype(jnp.bfloat16), w2_ref[...],
                preferred_element_type=jnp.float32)     # (TB, OUT) f32
    o_ref[...] = (y + b2_ref[...]).astype(o_ref.dtype)  # 784-wide store, no slice


def prepare_params(w1, b1, w2, b2):
    """Zero-pad to padded shapes and cast matmul weights to bf16.

    Padded W1 latent rows / hidden columns and padded W2 hidden rows are zero,
    and padded b1 columns are zero, so the extra hidden columns are exactly
    zero after ReLU and contribute nothing.  The output dimension is NOT
    padded (784 columns kept as-is).
    """
    b1 = jnp.reshape(b1, (1, -1)).astype(jnp.float32)
    b2 = jnp.reshape(b2, (1, -1)).astype(jnp.float32)
    w1_p = (jnp.zeros((LATENT_PAD, HIDDEN_PAD), jnp.bfloat16)
            .at[:LATENT_DIM, :HIDDEN].set(w1.astype(jnp.bfloat16)))
    b1_p = jnp.zeros((1, HIDDEN_PAD), jnp.float32).at[:, :HIDDEN].set(b1)
    w2_p = (jnp.zeros((HIDDEN_PAD, OUT), jnp.bfloat16)
            .at[:HIDDEN, :].set(w2.astype(jnp.bfloat16)))
    b2_p = b2  # (1, OUT) f32, unpadded
    return w1_p, b1_p, w2_p, b2_p


def decoder_forward(x, w1_p, b1_p, w2_p, b2_p, *, tb=512,
                    out_dtype=jnp.float32):
    """x: (B, LATENT_DIM) f32; padded/bf16 params from prepare_params().
    Returns (B, OUT) array of `out_dtype` (default f32, matching PyTorch)."""
    B = x.shape[0]

    # Adaptive batch tile:
    #  * TB is a multiple of 8 (sublane) and sized so padding waste is <8 rows
    #    per step (avoids the old up-to-TB-8 overshoot).
    #  * For large batches force >=2 grid steps so the "parallel" batch axis
    #    can be sharded across both TensorCores on v7x.
    nsteps = pl.cdiv(B, tb)
    if B > 256:
        nsteps = max(nsteps, 2)
    TB = _round_up(pl.cdiv(B, nsteps), 8)
    B_pad = nsteps * TB

    x_p = (jnp.zeros((B_pad, LATENT_PAD), jnp.bfloat16)
           .at[:B, :LATENT_DIM].set(x.astype(jnp.bfloat16)))

    grid = (nsteps,)
    out_bytes = jnp.dtype(out_dtype).itemsize
    flops = 2 * B_pad * (LATENT_PAD * HIDDEN_PAD + HIDDEN_PAD * OUT)
    bytes_accessed = (x_p.size * 2 + w1_p.size * 2 + b1_p.size * 4
                      + w2_p.size * 2 + b2_p.size * 4 + B_pad * OUT * out_bytes)

    out_p = pl.pallas_call(
        decoder_kernel,
        out_shape=jax.ShapeDtypeStruct((B_pad, OUT), out_dtype),
        grid_spec=pltpu.PrefetchScalarGridSpec(
            num_scalar_prefetch=0,
            grid=grid,
            in_specs=[
                pl.BlockSpec((TB, LATENT_PAD), lambda i: (i, 0)),
                # Constant index maps -> params stay VMEM-resident across steps.
                pl.BlockSpec((LATENT_PAD, HIDDEN_PAD), lambda i: (0, 0)),
                pl.BlockSpec((1, HIDDEN_PAD), lambda i: (0, 0)),
                pl.BlockSpec((HIDDEN_PAD, OUT), lambda i: (0, 0)),
                pl.BlockSpec((1, OUT), lambda i: (0, 0)),
            ],
            out_specs=pl.BlockSpec((TB, OUT), lambda i: (i, 0)),
        ),
        compiler_params=pltpu.CompilerParams(
            dimension_semantics=("parallel",),
            vmem_limit_bytes=32 * 1024 * 1024,
        ),
        cost_estimate=pl.CostEstimate(
            flops=flops, transcendentals=0, bytes_accessed=bytes_accessed),
    )(x_p, w1_p, b1_p, w2_p, b2_p)

    return out_p if B_pad == B else out_p[:B]


def init_params(key):
    """Deterministic init mirroring nn.Linear's uniform(-1/sqrt(fan_in), ...)."""
    k1, k2, k3, k4 = jax.random.split(key, 4)
    bound1 = 1.0 / jnp.sqrt(LATENT_DIM)
    bound2 = 1.0 / jnp.sqrt(HIDDEN)
    # PyTorch stores (out, in); keep (in, out) layout for the kernel matmuls.
    w1 = jax.random.uniform(k1, (LATENT_DIM, HIDDEN), jnp.float32, -bound1, bound1)
    b1 = jax.random.uniform(k2, (1, HIDDEN), jnp.float32, -bound1, bound1)
    w2 = jax.random.uniform(k3, (HIDDEN, OUT), jnp.float32, -bound2, bound2)
    b2 = jax.random.uniform(k4, (1, OUT), jnp.float32, -bound2, bound2)
    return w1, b1, w2, b2


if __name__ == "__main__":
    key = jax.random.PRNGKey(0)
    kx, kp = jax.random.split(key)

    B = 8  # small batch
    x = jax.random.normal(kx, (B, LATENT_DIM), jnp.float32)
    w1, b1, w2, b2 = init_params(kp)
    w1_p, b1_p, w2_p, b2_p = prepare_params(w1, b1, w2, b2)

    out = decoder_forward(x, w1_p, b1_p, w2_p, b2_p)
    out = jax.block_until_ready(out)
    assert out.shape == (B, OUT)
    assert out.dtype == jnp.float32

    # Tight check vs. a reference using the same bf16 dot operands / f32 acc.
    xb = x.astype(jnp.bfloat16)
    h_ref = jnp.maximum(
        jnp.dot(xb, w1.astype(jnp.bfloat16),
                preferred_element_type=jnp.float32) + b1, 0.0)
    ref_bf16 = jnp.dot(h_ref.astype(jnp.bfloat16), w2.astype(jnp.bfloat16),
                       preferred_element_type=jnp.float32) + b2
    assert jnp.allclose(out, ref_bf16, atol=2e-3, rtol=2e-3)

    # Loose check vs. the pure-f32 PyTorch-equivalent math (bf16 operand
    # rounding bounds the difference).
    ref_f32 = jnp.maximum(x @ w1 + b1, 0.0) @ w2 + b2
    assert jnp.allclose(out, ref_f32, atol=5e-2, rtol=5e-2)

    print("KERNEL_OK")
</pallas_src>

<mosaic_0001>
module attributes {stable_mosaic.version = 11 : i64} {
  func.func @decoder_kernel(%arg0: i32, %arg1: memref<8x64xbf16, #tpu.memory_space<vmem>>, %arg2: memref<64x512xbf16, #tpu.memory_space<vmem>>, %arg3: memref<1x512xf32, #tpu.memory_space<vmem>>, %arg4: memref<512x784xbf16, #tpu.memory_space<vmem>>, %arg5: memref<1x784xf32, #tpu.memory_space<vmem>>, %arg6: memref<8x784xf32, #tpu.memory_space<vmem>>) attributes {dimension_semantics = [#tpu.dimension_semantics<parallel>], iteration_bounds = array<i64: 1>, scalar_prefetch = 0 : i64, scratch_operands = 0 : i64, tpu.core_type = #tpu.core_type<tc>, window_params = [{transform_indices = @transform_0, window_bounds = array<i64: 8, 64>}, {pipeline_mode = #tpu.pipeline_mode<synchronous>, transform_indices = @transform_1, window_bounds = array<i64: 64, 512>}, {pipeline_mode = #tpu.pipeline_mode<synchronous>, transform_indices = @transform_2, window_bounds = array<i64: 1, 512>}, {pipeline_mode = #tpu.pipeline_mode<synchronous>, transform_indices = @transform_3, window_bounds = array<i64: 512, 784>}, {pipeline_mode = #tpu.pipeline_mode<synchronous>, transform_indices = @transform_4, window_bounds = array<i64: 1, 784>}, {transform_indices = @transform_5, window_bounds = array<i64: 8, 784>}]} {
    %c0 = arith.constant 0 : index
    %c0_0 = arith.constant 0 : index
    %0 = vector.load %arg1[%c0, %c0_0] : memref<8x64xbf16, #tpu.memory_space<vmem>>, vector<8x64xbf16>
    %c0_1 = arith.constant 0 : index
    %c0_2 = arith.constant 0 : index
    %1 = vector.load %arg2[%c0_1, %c0_2] : memref<64x512xbf16, #tpu.memory_space<vmem>>, vector<64x512xbf16>
    %cst = arith.constant dense<0.000000e+00> : vector<8x512xf32>
    %2 = tpu.matmul %0, %1, %cst {dimension_numbers = #tpu.dot_dimension_numbers<[1], [0], [0], [1], [0, 0, 1, 1], [], []>} : vector<8x64xbf16>, vector<64x512xbf16>, vector<8x512xf32> -> vector<8x512xf32>
    %c0_3 = arith.constant 0 : index
    %c0_4 = arith.constant 0 : index
    %3 = vector.load %arg3[%c0_3, %c0_4] : memref<1x512xf32, #tpu.memory_space<vmem>>, vector<1x512xf32>
    %4 = vector.broadcast %3 : vector<1x512xf32> to vector<8x512xf32>
    %5 = arith.addf %2, %4 : vector<8x512xf32>
    %cst_5 = arith.constant 0.000000e+00 : f32
    %6 = vector.broadcast %cst_5 : f32 to vector<8x512xf32>
    %7 = arith.maximumf %5, %6 : vector<8x512xf32>
    %8 = arith.truncf %7 : vector<8x512xf32> to vector<8x512xbf16>
    %c0_6 = arith.constant 0 : index
    %c0_7 = arith.constant 0 : index
    %9 = vector.load %arg4[%c0_6, %c0_7] : memref<512x784xbf16, #tpu.memory_space<vmem>>, vector<512x784xbf16>
    %cst_8 = arith.constant dense<0.000000e+00> : vector<8x784xf32>
    %10 = tpu.matmul %8, %9, %cst_8 {dimension_numbers = #tpu.dot_dimension_numbers<[1], [0], [0], [1], [0, 0, 1, 1], [], []>} : vector<8x512xbf16>, vector<512x784xbf16>, vector<8x784xf32> -> vector<8x784xf32>
    %c0_9 = arith.constant 0 : index
    %c0_10 = arith.constant 0 : index
    %11 = vector.load %arg5[%c0_9, %c0_10] : memref<1x784xf32, #tpu.memory_space<vmem>>, vector<1x784xf32>
    %12 = vector.broadcast %11 : vector<1x784xf32> to vector<8x784xf32>
    %13 = arith.addf %10, %12 : vector<8x784xf32>
    %c0_11 = arith.constant 0 : index
    %c0_12 = arith.constant 0 : index
    %14 = vector.load %arg6[%c0_11, %c0_12] : memref<8x784xf32, #tpu.memory_space<vmem>>, vector<8x784xf32>
    tpu.vector_store %arg6[%c0_11, %c0_12], %13 {strides = array<i32>} : memref<8x784xf32, #tpu.memory_space<vmem>>, vector<8x784xf32>,
    return
  }
  func.func @transform_0(%arg0: i32) -> (i32, i32) {
    %c0_i32 = arith.constant 0 : i32
    %c0_i32_0 = arith.constant 0 : i32
    return %arg0, %c0_i32 : i32, i32
  }
  func.func @transform_1(%arg0: i32) -> (i32, i32) {
    %c0_i32 = arith.constant 0 : i32
    %c0_i32_0 = arith.constant 0 : i32
    %c0_i32_1 = arith.constant 0 : i32
    return %c0_i32, %c0_i32_0 : i32, i32
  }
  func.func @transform_2(%arg0: i32) -> (i32, i32) {
    %c0_i32 = arith.constant 0 : i32
    %c0_i32_0 = arith.constant 0 : i32
    %c0_i32_1 = arith.constant 0 : i32
    return %c0_i32, %c0_i32_0 : i32, i32
  }
  func.func @transform_3(%arg0: i32) -> (i32, i32) {
    %c0_i32 = arith.constant 0 : i32
    %c0_i32_0 = arith.constant 0 : i32
    %c0_i32_1 = arith.constant 0 : i32
    return %c0_i32, %c0_i32_0 : i32, i32
  }
  func.func @transform_4(%arg0: i32) -> (i32, i32) {
    %c0_i32 = arith.constant 0 : i32
    %c0_i32_0 = arith.constant 0 : i32
    %c0_i32_1 = arith.constant 0 : i32
    return %c0_i32, %c0_i32_0 : i32, i32
  }
  func.func @transform_5(%arg0: i32) -> (i32, i32) {
    %c0_i32 = arith.constant 0 : i32
    %c0_i32_0 = arith.constant 0 : i32
    return %arg0, %c0_i32 : i32, i32
  }
}

</mosaic_0001>

<llo_original>
// kernel: tpu_custom_call.1
$region0: #{tpu_custom_call.1}
  #allocation0 [shape = 'u32[]', space=smem, size = 0x4, offset = 0x4, fixed_abs, tag = 'smem constant byte address 0x4 - core index']
  #allocation1 [shape = 'u32[144,128]{1,0:T(1,128)}', space=vmem, size = 0x12000, scoped, tag = 'internal scratch']
  %s0 = inlined_call_operand.vmem [shape: bf16[8,64], index: 0, kind: input, shape index: {}]
  %s1 = inlined_call_operand.vmem [shape: bf16[64,512], index: 1, kind: input, shape index: {}]
  %s2 = inlined_call_operand.vmem [shape: f32[1,512], index: 2, kind: input, shape index: {}]
  %s3 = inlined_call_operand.vmem [shape: bf16[512,784], index: 3, kind: input, shape index: {}]
  %s4 = inlined_call_operand.vmem [shape: f32[1,784], index: 4, kind: input, shape index: {}]
  %s5 = inlined_call_operand.hbm [shape: f32[8,784], index: 5, kind: output, shape index: {}]
  %s6 = sld [smem:[#allocation0]]
  $region30: #{tpu_custom_call.1} parent=0
    _
  %s8 = ssub.s32 1, %s6
  %s9 = scalar_select 0, %s8, %s6
  $region1: #{tpu_custom_call.1} parent=0
    #allocation2 [shape = 'u8[28672]{0}', space=vmem, size = 0x7000, scoped, tag = 'output window, operand 0, single buffered']
    #allocation3 [shape = 's32[1]{0}', space=sflag, size = 0x4, scoped, tag = 'scoped memory for tpu_custom_call.1']
    %10 = vsyncpa [#allocation3], 0
    // Predicated region
    $region2: #{tpu_custom_call.1} parent=1 // pred_check
      _
    $region3: #{tpu_custom_call.1} parent=1 // pred_check_branch
      %12 = sbr.rel (0) target = $region5
    $region4: #{tpu_custom_call.1} parent=1 // pred_region
      _
    $region5: #{tpu_custom_call.1} parent=1 // pred_fallthru
      _
    // Predicated region
    $region6: #{tpu_custom_call.1} parent=1 // pred_check
      _
    $region7: #{tpu_custom_call.1} parent=1 // pred_check_branch
      %14 = sbr.rel (0) target = $region9
    $region8: #{tpu_custom_call.1} parent=1 // pred_region
      _
    $region9: #{tpu_custom_call.1} parent=1 // pred_fallthru
      _
    // Predicated region
    $region10: #{tpu_custom_call.1} parent=1 // pred_check
      _
    $region11: #{tpu_custom_call.1} parent=1 // pred_check_branch
      %16 = sbr.rel (0) target = $region13
    $region12: #{tpu_custom_call.1} parent=1 // pred_region
      _
    $region13: #{tpu_custom_call.1} parent=1 // pred_fallthru
      _
    // Predicated region
    $region14: #{tpu_custom_call.1} parent=1 // pred_check
      _
    $region15: #{tpu_custom_call.1} parent=1 // pred_check_branch
      %18 = sbr.rel (0) target = $region17
    $region16: #{tpu_custom_call.1} parent=1 // pred_region
      _
    $region17: #{tpu_custom_call.1} parent=1 // pred_fallthru
      _
    // Predicated region
    $region18: #{tpu_custom_call.1} parent=1 // pred_check
      _
    $region19: #{tpu_custom_call.1} parent=1 // pred_check_branch
      %20 = sbr.rel (0) target = $region21
    $region20: #{tpu_custom_call.1} parent=1 // pred_region
      _
    $region21: #{tpu_custom_call.1} parent=1 // pred_fallthru
      _
    %v22 = vld [vmem:[%s0] sm:$0xf]
    %v23 = vld [vmem:[%s1] sm:$0xff]
    %v24 = vld [vmem:[%s1 + $0x8] sm:$0xff]
    %v25 = vld [vmem:[%s1 + $0x10] sm:$0xff]
    %v26 = vld [vmem:[%s1 + $0x18] sm:$0xff]
    %v27 = vld [vmem:[%s1 + $0x20] sm:$0xff]
    %v28 = vld [vmem:[%s1 + $0x28] sm:$0xff]
    %v29 = vld [vmem:[%s1 + $0x30] sm:$0xff]
    %v30 = vld [vmem:[%s1 + $0x38] sm:$0xff]
    %v31 = vld [vmem:[%s1 + $0x40] sm:$0xff]
    %v32 = vld [vmem:[%s1 + $0x48] sm:$0xff]
    %v33 = vld [vmem:[%s1 + $0x50] sm:$0xff]
    %v34 = vld [vmem:[%s1 + $0x58] sm:$0xff]
    %v35 = vld [vmem:[%s1 + $0x60] sm:$0xff]
    %v36 = vld [vmem:[%s1 + $0x68] sm:$0xff]
    %v37 = vld [vmem:[%s1 + $0x70] sm:$0xff]
    %v38 = vld [vmem:[%s1 + $0x78] sm:$0xff]
    %v39 = vld [vmem:[%s2] sm:$0xf]
    %v41 = vlaneseq
    %v42 = vshrl.u32 %v41, 7
    %v43 = vsub.s32 0, %v42
    %v44 = vrot.slane %v39, %v43
    %v45 = vlaneseq
    %v46 = vshrl.u32 %v45, 7
    %v47 = vsub.s32 1, %v46
    %v48 = vrot.slane %v39, %v47
    %v49 = vlaneseq
    %v50 = vshrl.u32 %v49, 7
    %v51 = vsub.s32 2, %v50
    %v52 = vrot.slane %v39, %v51
    %v53 = vlaneseq
    %v54 = vshrl.u32 %v53, 7
    %v55 = vsub.s32 3, %v54
    %v56 = vrot.slane %v39, %v55
    %v77 = vunpack.c.l.b16 %v23
    %v78 = vunpack.c.h.b16 %v23
    %v79 = vunpack.c.l.b16 %v24
    %v80 = vunpack.c.h.b16 %v24
    %v81 = vunpack.c.l.b16 %v25
    %v82 = vunpack.c.h.b16 %v25
    %v83 = vunpack.c.l.b16 %v26
    %v84 = vunpack.c.h.b16 %v26
    %v85 = vunpack.c.l.b16 %v27
    %v86 = vunpack.c.h.b16 %v27
    %v87 = vunpack.c.l.b16 %v28
    %v88 = vunpack.c.h.b16 %v28
    %v89 = vunpack.c.l.b16 %v29
    %v90 = vunpack.c.h.b16 %v29
    %v91 = vunpack.c.l.b16 %v30
    %v92 = vunpack.c.h.b16 %v30
    %v93 = vunpack.c.l.b16 %v31
    %v94 = vunpack.c.h.b16 %v31
    %v95 = vunpack.c.l.b16 %v32
    %v96 = vunpack.c.h.b16 %v32
    %v97 = vunpack.c.l.b16 %v33
    %v98 = vunpack.c.h.b16 %v33
    %v99 = vunpack.c.l.b16 %v34
    %v100 = vunpack.c.h.b16 %v34
    %v101 = vunpack.c.l.b16 %v35
    %v102 = vunpack.c.h.b16 %v35
    %v103 = vunpack.c.l.b16 %v36
    %v104 = vunpack.c.h.b16 %v36
    %v105 = vunpack.c.l.b16 %v37
    %v106 = vunpack.c.h.b16 %v37
    %v107 = vunpack.c.l.b16 %v38
    %v108 = vunpack.c.h.b16 %v38
    %v109 = vpack.c.b16 %v81, %v77
    %v110 = vpack.c.b16 %v82, %v78
    %v111 = vpack.c.b16 %v83, %v79
    %v112 = vpack.c.b16 %v84, %v80
    %v113 = vpack.c.b16 %v89, %v85
    %v114 = vpack.c.b16 %v90, %v86
    %v115 = vpack.c.b16 %v91, %v87
    %v116 = vpack.c.b16 %v92, %v88
    %v117 = vpack.c.b16 %v97, %v93
    %v118 = vpack.c.b16 %v98, %v94
    %v119 = vpack.c.b16 %v99, %v95
    %v120 = vpack.c.b16 %v100, %v96
    %v121 = vpack.c.b16 %v105, %v101
    %v122 = vpack.c.b16 %v106, %v102
    %v123 = vpack.c.b16 %v107, %v103
    %v124 = vpack.c.b16 %v108, %v104
    %vm141 = vcmask 523264
    %v143 = vsel %vm141, %v22, 0
    %145 = vmatprep.subr.bf16.mxu0 %v110
    %146 = vmatpush1.bf16.msra.mxu0 %v109
    %147 = vmatprep.subr.bf16.mxu0 %v114
    %148 = vmatpush1.bf16.msra.mxu0 %v113
    %149 = vmatprep.subr.bf16.mxu0 %v118
    %150 = vmatpush1.bf16.msra.mxu0 %v117
    %151 = vmatprep.subr.bf16.mxu0 %v122
    %152 = vmatpush1.bf16.msra.mxu0 %v121
    %153 = vmatprep.subr.bf16.mxu0 0
    %154 = vmatpush1.bf16.msra.mxu0 0
    %155 = vmatprep.subr.bf16.mxu0 0
    %156 = vmatpush1.bf16.msra.mxu0 0
    %157 = vmatprep.subr.bf16.mxu0 0
    %158 = vmatpush1.bf16.msra.mxu0 0
    %159 = vmatprep.subr.bf16.mxu0 0
    %160 = vmatpush1.bf16.msra.mxu0 0
    %161 = vmatprep.subr.bf16.mxu0 0
    %162 = vmatpush1.bf16.msra.mxu0 0
    %163 = vmatprep.subr.bf16.mxu0 0
    %164 = vmatpush1.bf16.msra.mxu0 0
    %165 = vmatprep.subr.bf16.mxu0 0
    %166 = vmatpush1.bf16.msra.mxu0 0
    %167 = vmatprep.subr.bf16.mxu0 0
    %168 = vmatpush1.bf16.msra.mxu0 0
    %169 = vmatprep.subr.bf16.mxu0 0
    %170 = vmatpush1.bf16.msra.mxu0 0
    %171 = vmatprep.subr.bf16.mxu0 0
    %172 = vmatpush1.bf16.msra.mxu0 0
    %173 = vmatprep.subr.bf16.mxu0 0
    %174 = vmatpush1.bf16.msra.mxu0 0
    %175 = vmatprep.subr.bf16.mxu0 0
    %176 = vmatpush1.bf16.msra.mxu0 0
    %177 = vmatprep.mubr.bf16.mxu0 0
    %178 = vmatmul.mubr.bf16.gmra.mrb[0].mxu0 %v143
    %v179 = vpop.f32.mrb[0].mxu0
    %v180 = vadd.f32 %v44, %v179
    %v181 = vpop.f32.mrb[0].mxu0
    %v182 = vadd.f32 %v48, %v181
    %v183 = vpop.f32.mrb[0].mxu0
    %v184 = vpop.f32.mrb[0].mxu0
    %185 = vdwg.mxu0
    %186 = vmatprep.subr.bf16.mxu0 %v112
    %187 = vmatpush1.bf16.msra.mxu0 %v111
    %188 = vmatprep.subr.bf16.mxu0 %v116
    %189 = vmatpush1.bf16.msra.mxu0 %v115
    %190 = vmatprep.subr.bf16.mxu0 %v120
    %191 = vmatpush1.bf16.msra.mxu0 %v119
    %192 = vmatprep.subr.bf16.mxu0 %v124
    %193 = vmatpush1.bf16.msra.mxu0 %v123
    %194 = vmatprep.subr.bf16.mxu0 0
    %195 = vmatpush1.bf16.msra.mxu0 0
    %196 = vmatprep.subr.bf16.mxu0 0
    %197 = vmatpush1.bf16.msra.mxu0 0
    %198 = vmatprep.subr.bf16.mxu0 0
    %199 = vmatpush1.bf16.msra.mxu0 0
    %200 = vmatprep.subr.bf16.mxu0 0
    %201 = vmatpush1.bf16.msra.mxu0 0
    %202 = vmatprep.subr.bf16.mxu0 0
    %203 = vmatpush1.bf16.msra.mxu0 0
    %204 = vmatprep.subr.bf16.mxu0 0
    %205 = vmatpush1.bf16.msra.mxu0 0
    %206 = vmatprep.subr.bf16.mxu0 0
    %207 = vmatpush1.bf16.msra.mxu0 0
    %208 = vmatprep.subr.bf16.mxu0 0
    %209 = vmatpush1.bf16.msra.mxu0 0
    %210 = vmatprep.subr.bf16.mxu0 0
    %211 = vmatpush1.bf16.msra.mxu0 0
    %212 = vmatprep.subr.bf16.mxu0 0
    %213 = vmatpush1.bf16.msra.mxu0 0
    %214 = vmatprep.subr.bf16.mxu0 0
    %215 = vmatpush1.bf16.msra.mxu0 0
    %216 = vmatprep.subr.bf16.mxu0 0
    %217 = vmatpush1.bf16.msra.mxu0 0
    %218 = vmatprep.mubr.bf16.mxu0 0
    %219 = vmatmul.mubr.bf16.gmra.mrb[0].mxu0 %v143
    %v220 = vpop.f32.mrb[0].mxu0
    %v221 = vadd.f32 %v52, %v220
    %v222 = vpop.f32.mrb[0].mxu0
    %v223 = vadd.f32 %v56, %v222
    %v224 = vpop.f32.mrb[0].mxu0
    %v225 = vpop.f32.mrb[0].mxu0
    %226 = vdwg.mxu0
    %v227 = vmax.f32 %v180, 0.0
    %v228 = vmax.f32 %v182, 0.0
    %v229 = vmax.f32 %v221, 0.0
    %v230 = vmax.f32 %v223, 0.0
    %v231 = vpack.c.bf16 %v227, %v227
    %v232 = vpack.c.bf16 %v228, %v228
    %v233 = vpack.c.bf16 %v229, %v229
    %v234 = vpack.c.bf16 %v230, %v230
    %v235 = vld [vmem:[%s3] sm:$0xff]
    %v236 = vld [vmem:[%s3 + $0x8] sm:$0xff]
    %v237 = vld [vmem:[%s3 + $0x10] sm:$0xff]
    %v238 = vld [vmem:[%s3 + $0x18] sm:$0xf]
    %v239 = vld [vmem:[%s3 + $0x1c] sm:$0xff]
    %v240 = vld [vmem:[%s3 + $0x24] sm:$0xff]
    %v241 = vld [vmem:[%s3 + $0x2c] sm:$0xff]
    %v242 = vld [vmem:[%s3 + $0x34] sm:$0xf]
    %v243 = vld [vmem:[%s3 + $0x38] sm:$0xff]
    %v244 = vld [vmem:[%s3 + $0x40] sm:$0xff]
    %v245 = vld [vmem:[%s3 + $0x48] sm:$0xff]
    %v246 = vld [vmem:[%s3 + $0x50] sm:$0xf]
    %v247 = vld [vmem:[%s3 + $0x54] sm:$0xff]
    %v248 = vld [vmem:[%s3 + $0x5c] sm:$0xff]
    %v249 = vld [vmem:[%s3 + $0x64] sm:$0xff]
    %v250 = vld [vmem:[%s3 + $0x6c] sm:$0xf]
    %v251 = vld [vmem:[%s3 + $0x70] sm:$0xff]
    %v252 = vld [vmem:[%s3 + $0x78] sm:$0xff]
    %v253 = vld [vmem:[%s3 + $0x80] sm:$0xff]
    %v254 = vld [vmem:[%s3 + $0x88] sm:$0xf]
    %v255 = vld [vmem:[%s3 + $0x8c] sm:$0xff]
    %v256 = vld [vmem:[%s3 + $0x94] sm:$0xff]
    %v257 = vld [vmem:[%s3 + $0x9c] sm:$0xff]
    %v258 = vld [vmem:[%s3 + $0xa4] sm:$0xf]
    %v259 = vld [vmem:[%s3 + $0xa8] sm:$0xff]
    %v260 = vld [vmem:[%s3 + $0xb0] sm:$0xff]
    %v261 = vld [vmem:[%s3 + $0xb8] sm:$0xff]
    %v262 = vld [vmem:[%s3 + $0xc0] sm:$0xf]
    %v263 = vld [vmem:[%s3 + $0xc4] sm:$0xff]
    %v264 = vld [vmem:[%s3 + $0xcc] sm:$0xff]
    %v265 = vld [vmem:[%s3 + $0xd4] sm:$0xff]
    %v266 = vld [vmem:[%s3 + $0xdc] sm:$0xf]
    %v267 = vld [vmem:[%s3 + $0xe0] sm:$0xff]
    %v268 = vld [vmem:[%s3 + $0xe8] sm:$0xff]
    %v269 = vld [vmem:[%s3 + $0xf0] sm:$0xff]
    %v270 = vld [vmem:[%s3 + $0xf8] sm:$0xf]
    %v271 = vld [vmem:[%s3 + $0xfc] sm:$0xff]
    %v272 = vld [vmem:[%s3 + $0x104] sm:$0xff]
    %v273 = vld [vmem:[%s3 + $0x10c] sm:$0xff]
    %v274 = vld [vmem:[%s3 + $0x114] sm:$0xf]
    %v275 = vld [vmem:[%s3 + $0x118] sm:$0xff]
    %v276 = vld [vmem:[%s3 + $0x120] sm:$0xff]
    %v277 = vld [vmem:[%s3 + $0x128] sm:$0xff]
    %v278 = vld [vmem:[%s3 + $0x130] sm:$0xf]
    %v279 = vld [vmem:[%s3 + $0x134] sm:$0xff]
    %v280 = vld [vmem:[%s3 + $0x13c] sm:$0xff]
    %v281 = vld [vmem:[%s3 + $0x144] sm:$0xff]
    %v282 = vld [vmem:[%s3 + $0x14c] sm:$0xf]
    %v283 = vld [vmem:[%s3 + $0x150] sm:$0xff]
    %v284 = vld [vmem:[%s3 + $0x158] sm:$0xff]
    %v285 = vld [vmem:[%s3 + $0x160] sm:$0xff]
    %v286 = vld [vmem:[%s3 + $0x168] sm:$0xf]
    %v287 = vld [vmem:[%s3 + $0x16c] sm:$0xff]
    %v288 = vld [vmem:[%s3 + $0x174] sm:$0xff]
    %v289 = vld [vmem:[%s3 + $0x17c] sm:$0xff]
    %v290 = vld [vmem:[%s3 + $0x184] sm:$0xf]
    %v291 = vld [vmem:[%s3 + $0x188] sm:$0xff]
    %v292 = vld [vmem:[%s3 + $0x190] sm:$0xff]
    %v293 = vld [vmem:[%s3 + $0x198] sm:$0xff]
    %v294 = vld [vmem:[%s3 + $0x1a0] sm:$0xf]
    %v295 = vld [vmem:[%s3 + $0x1a4] sm:$0xff]
    %v296 = vld [vmem:[%s3 + $0x1ac] sm:$0xff]
    %v297 = vld [vmem:[%s3 + $0x1b4] sm:$0xff]
    %v298 = vld [vmem:[%s3 + $0x1bc] sm:$0xf]
    %v299 = vld [vmem:[%s3 + $0x1c0] sm:$0xff]
    %v300 = vld [vmem:[%s3 + $0x1c8] sm:$0xff]
    %v301 = vld [vmem:[%s3 + $0x1d0] sm:$0xff]
    %v302 = vld [vmem:[%s3 + $0x1d8] sm:$0xf]
    %v303 = vld [vmem:[%s3 + $0x1dc] sm:$0xff]
    %v304 = vld [vmem:[%s3 + $0x1e4] sm:$0xff]
    %v305 = vld [vmem:[%s3 + $0x1ec] sm:$0xff]
    %v306 = vld [vmem:[%s3 + $0x1f4] sm:$0xf]
    %v307 = vld [vmem:[%s3 + $0x1f8] sm:$0xff]
    %v308 = vld [vmem:[%s3 + $0x200] sm:$0xff]
    %v309 = vld [vmem:[%s3 + $0x208] sm:$0xff]
    %v310 = vld [vmem:[%s3 + $0x210] sm:$0xf]
    %v311 = vld [vmem:[%s3 + $0x214] sm:$0xff]
    %v312 = vld [vmem:[%s3 + $0x21c] sm:$0xff]
    %v313 = vld [vmem:[%s3 + $0x224] sm:$0xff]
    %v314 = vld [vmem:[%s3 + $0x22c] sm:$0xf]
    %v315 = vld [vmem:[%s3 + $0x230] sm:$0xff]
    %v316 = vld [vmem:[%s3 + $0x238] sm:$0xff]
    %v317 = vld [vmem:[%s3 + $0x240] sm:$0xff]
    %v318 = vld [vmem:[%s3 + $0x248] sm:$0xf]
    %v319 = vld [vmem:[%s3 + $0x24c] sm:$0xff]
    %v320 = vld [vmem:[%s3 + $0x254] sm:$0xff]
    %v321 = vld [vmem:[%s3 + $0x25c] sm:$0xff]
    %v322 = vld [vmem:[%s3 + $0x264] sm:$0xf]
    %v323 = vld [vmem:[%s3 + $0x268] sm:$0xff]
    %v324 = vld [vmem:[%s3 + $0x270] sm:$0xff]
    %v325 = vld [vmem:[%s3 + $0x278] sm:$0xff]
    %v326 = vld [vmem:[%s3 + $0x280] sm:$0xf]
    %v327 = vld [vmem:[%s3 + $0x284] sm:$0xff]
    %v328 = vld [vmem:[%s3 + $0x28c] sm:$0xff]
    %v329 = vld [vmem:[%s3 + $0x294] sm:$0xff]
    %v330 = vld [vmem:[%s3 + $0x29c] sm:$0xf]
    %v331 = vld [vmem:[%s3 + $0x2a0] sm:$0xff]
    %v332 = vld [vmem:[%s3 + $0x2a8] sm:$0xff]
    %v333 = vld [vmem:[%s3 + $0x2b0] sm:$0xff]
    %v334 = vld [vmem:[%s3 + $0x2b8] sm:$0xf]
    %v335 = vld [vmem:[%s3 + $0x2bc] sm:$0xff]
    %v336 = vld [vmem:[%s3 + $0x2c4] sm:$0xff]
    %v337 = vld [vmem:[%s3 + $0x2cc] sm:$0xff]
    %v338 = vld [vmem:[%s3 + $0x2d4] sm:$0xf]
    %v339 = vld [vmem:[%s3 + $0x2d8] sm:$0xff]
    %v340 = vld [vmem:[%s3 + $0x2e0] sm:$0xff]
    %v341 = vld [vmem:[%s3 + $0x2e8] sm:$0xff]
    %v342 = vld [vmem:[%s3 + $0x2f0] sm:$0xf]
    %v343 = vld [vmem:[%s3 + $0x2f4] sm:$0xff]
    %v344 = vld [vmem:[%s3 + $0x2fc] sm:$0xff]
    %v345 = vld [vmem:[%s3 + $0x304] sm:$0xff]
    %v346 = vld [vmem:[%s3 + $0x30c] sm:$0xf]
    %v347 = vld [vmem:[%s3 + $0x310] sm:$0xff]
    %v348 = vld [vmem:[%s3 + $0x318] sm:$0xff]
    %v349 = vld [vmem:[%s3 + $0x320] sm:$0xff]
    %v350 = vld [vmem:[%s3 + $0x328] sm:$0xf]
    %v351 = vld [vmem:[%s3 + $0x32c] sm:$0xff]
    %v352 = vld [vmem:[%s3 + $0x334] sm:$0xff]
    %v353 = vld [vmem:[%s3 + $0x33c] sm:$0xff]
    %v354 = vld [vmem:[%s3 + $0x344] sm:$0xf]
    %v355 = vld [vmem:[%s3 + $0x348] sm:$0xff]
    %v356 = vld [vmem:[%s3 + $0x350] sm:$0xff]
    %v357 = vld [vmem:[%s3 + $0x358] sm:$0xff]
    %v358 = vld [vmem:[%s3 + $0x360] sm:$0xf]
    %v359 = vld [vmem:[%s3 + $0x364] sm:$0xff]
    %v360 = vld [vmem:[%s3 + $0x36c] sm:$0xff]
    %v361 = vld [vmem:[%s3 + $0x374] sm:$0xff]
    %v362 = vld [vmem:[%s3 + $0x37c] sm:$0xf]
    %v363 = vld [vmem:[%s3 + $0x380] sm:$0xff]
    %v364 = vld [vmem:[%s3 + $0x388] sm:$0xff]
    %v365 = vld [vmem:[%s3 + $0x390] sm:$0xff]
    %v366 = vld [vmem:[%s3 + $0x398] sm:$0xf]
    %v367 = vld [vmem:[%s3 + $0x39c] sm:$0xff]
    %v368 = vld [vmem:[%s3 + $0x3a4] sm:$0xff]
    %v369 = vld [vmem:[%s3 + $0x3ac] sm:$0xff]
    %v370 = vld [vmem:[%s3 + $0x3b4] sm:$0xf]
    %v371 = vld [vmem:[%s3 + $0x3b8] sm:$0xff]
    %v372 = vld [vmem:[%s3 + $0x3c0] sm:$0xff]
    %v373 = vld [vmem:[%s3 + $0x3c8] sm:$0xff]
    %v374 = vld [vmem:[%s3 + $0x3d0] sm:$0xf]
    %v375 = vld [vmem:[%s3 + $0x3d4] sm:$0xff]
    %v376 = vld [vmem:[%s3 + $0x3dc] sm:$0xff]
    %v377 = vld [vmem:[%s3 + $0x3e4] sm:$0xff]
    %v378 = vld [vmem:[%s3 + $0x3ec] sm:$0xf]
    %v379 = vld [vmem:[%s3 + $0x3f0] sm:$0xff]
    %v380 = vld [vmem:[%s3 + $0x3f8] sm:$0xff]
    %v381 = vld [vmem:[%s3 + $0x400] sm:$0xff]
    %v382 = vld [vmem:[%s3 + $0x408] sm:$0xf]
    %v383 = vld [vmem:[%s3 + $0x40c] sm:$0xff]
    %v384 = vld [vmem:[%s3 + $0x414] sm:$0xff]
    %v385 = vld [vmem:[%s3 + $0x41c] sm:$0xff]
    %v386 = vld [vmem:[%s3 + $0x424] sm:$0xf]
    %v387 = vld [vmem:[%s3 + $0x428] sm:$0xff]
    %v388 = vld [vmem:[%s3 + $0x430] sm:$0xff]
    %v389 = vld [vmem:[%s3 + $0x438] sm:$0xff]
    %v390 = vld [vmem:[%s3 + $0x440] sm:$0xf]
    %v391 = vld [vmem:[%s3 + $0x444] sm:$0xff]
    %v392 = vld [vmem:[%s3 + $0x44c] sm:$0xff]
    %v393 = vld [vmem:[%s3 + $0x454] sm:$0xff]
    %v394 = vld [vmem:[%s3 + $0x45c] sm:$0xf]
    %v395 = vld [vmem:[%s3 + $0x460] sm:$0xff]
    %v396 = vld [vmem:[%s3 + $0x468] sm:$0xff]
    %v397 = vld [vmem:[%s3 + $0x470] sm:$0xff]
    %v398 = vld [vmem:[%s3 + $0x478] sm:$0xf]
    %v399 = vld [vmem:[%s3 + $0x47c] sm:$0xff]
    %v400 = vld [vmem:[%s3 + $0x484] sm:$0xff]
    %v401 = vld [vmem:[%s3 + $0x48c] sm:$0xff]
    %v402 = vld [vmem:[%s3 + $0x494] sm:$0xf]
    %v403 = vld [vmem:[%s3 + $0x498] sm:$0xff]
    %v404 = vld [vmem:[%s3 + $0x4a0] sm:$0xff]
    %v405 = vld [vmem:[%s3 + $0x4a8] sm:$0xff]
    %v406 = vld [vmem:[%s3 + $0x4b0] sm:$0xf]
    %v407 = vld [vmem:[%s3 + $0x4b4] sm:$0xff]
    %v408 = vld [vmem:[%s3 + $0x4bc] sm:$0xff]
    %v409 = vld [vmem:[%s3 + $0x4c4] sm:$0xff]
    %v410 = vld [vmem:[%s3 + $0x4cc] sm:$0xf]
    %v411 = vld [vmem:[%s3 + $0x4d0] sm:$0xff]
    %v412 = vld [vmem:[%s3 + $0x4d8] sm:$0xff]
    %v413 = vld [vmem:[%s3 + $0x4e0] sm:$0xff]
    %v414 = vld [vmem:[%s3 + $0x4e8] sm:$0xf]
    %v415 = vld [vmem:[%s3 + $0x4ec] sm:$0xff]
    %v416 = vld [vmem:[%s3 + $0x4f4] sm:$0xff]
    %v417 = vld [vmem:[%s3 + $0x4fc] sm:$0xff]
    %v418 = vld [vmem:[%s3 + $0x504] sm:$0xf]
    %v419 = vld [vmem:[%s3 + $0x508] sm:$0xff]
    %v420 = vld [vmem:[%s3 + $0x510] sm:$0xff]
    %v421 = vld [vmem:[%s3 + $0x518] sm:$0xff]
    %v422 = vld [vmem:[%s3 + $0x520] sm:$0xf]
    %v423 = vld [vmem:[%s3 + $0x524] sm:$0xff]
    %v424 = vld [vmem:[%s3 + $0x52c] sm:$0xff]
    %v425 = vld [vmem:[%s3 + $0x534] sm:$0xff]
    %v426 = vld [vmem:[%s3 + $0x53c] sm:$0xf]
    %v427 = vld [vmem:[%s3 + $0x540] sm:$0xff]
    %v428 = vld [vmem:[%s3 + $0x548] sm:$0xff]
    %v429 = vld [vmem:[%s3 + $0x550] sm:$0xff]
    %v430 = vld [vmem:[%s3 + $0x558] sm:$0xf]
    %v431 = vld [vmem:[%s3 + $0x55c] sm:$0xff]
    %v432 = vld [vmem:[%s3 + $0x564] sm:$0xff]
    %v433 = vld [vmem:[%s3 + $0x56c] sm:$0xff]
    %v434 = vld [vmem:[%s3 + $0x574] sm:$0xf]
    %v435 = vld [vmem:[%s3 + $0x578] sm:$0xff]
    %v436 = vld [vmem:[%s3 + $0x580] sm:$0xff]
    %v437 = vld [vmem:[%s3 + $0x588] sm:$0xff]
    %v438 = vld [vmem:[%s3 + $0x590] sm:$0xf]
    %v439 = vld [vmem:[%s3 + $0x594] sm:$0xff]
    %v440 = vld [vmem:[%s3 + $0x59c] sm:$0xff]
    %v441 = vld [vmem:[%s3 + $0x5a4] sm:$0xff]
    %v442 = vld [vmem:[%s3 + $0x5ac] sm:$0xf]
    %v443 = vld [vmem:[%s3 + $0x5b0] sm:$0xff]
    %v444 = vld [vmem:[%s3 + $0x5b8] sm:$0xff]
    %v445 = vld [vmem:[%s3 + $0x5c0] sm:$0xff]
    %v446 = vld [vmem:[%s3 + $0x5c8] sm:$0xf]
    %v447 = vld [vmem:[%s3 + $0x5cc] sm:$0xff]
    %v448 = vld [vmem:[%s3 + $0x5d4] sm:$0xff]
    %v449 = vld [vmem:[%s3 + $0x5dc] sm:$0xff]
    %v450 = vld [vmem:[%s3 + $0x5e4] sm:$0xf]
    %v451 = vld [vmem:[%s3 + $0x5e8] sm:$0xff]
    %v452 = vld [vmem:[%s3 + $0x5f0] sm:$0xff]
    %v453 = vld [vmem:[%s3 + $0x5f8] sm:$0xff]
    %v454 = vld [vmem:[%s3 + $0x600] sm:$0xf]
    %v455 = vld [vmem:[%s3 + $0x604] sm:$0xff]
    %v456 = vld [vmem:[%s3 + $0x60c] sm:$0xff]
    %v457 = vld [vmem:[%s3 + $0x614] sm:$0xff]
    %v458 = vld [vmem:[%s3 + $0x61c] sm:$0xf]
    %v459 = vld [vmem:[%s3 + $0x620] sm:$0xff]
    %v460 = vld [vmem:[%s3 + $0x628] sm:$0xff]
    %v461 = vld [vmem:[%s3 + $0x630] sm:$0xff]
    %v462 = vld [vmem:[%s3 + $0x638] sm:$0xf]
    %v463 = vld [vmem:[%s3 + $0x63c] sm:$0xff]
    %v464 = vld [vmem:[%s3 + $0x644] sm:$0xff]
    %v465 = vld [vmem:[%s3 + $0x64c] sm:$0xff]
    %v466 = vld [vmem:[%s3 + $0x654] sm:$0xf]
    %v467 = vld [vmem:[%s3 + $0x658] sm:$0xff]
    %v468 = vld [vmem:[%s3 + $0x660] sm:$0xff]
    %v469 = vld [vmem:[%s3 + $0x668] sm:$0xff]
    %v470 = vld [vmem:[%s3 + $0x670] sm:$0xf]
    %v471 = vld [vmem:[%s3 + $0x674] sm:$0xff]
    %v472 = vld [vmem:[%s3 + $0x67c] sm:$0xff]
    %v473 = vld [vmem:[%s3 + $0x684] sm:$0xff]
    %v474 = vld [vmem:[%s3 + $0x68c] sm:$0xf]
    %v475 = vld [vmem:[%s3 + $0x690] sm:$0xff]
    %v476 = vld [vmem:[%s3 + $0x698] sm:$0xff]
    %v477 = vld [vmem:[%s3 + $0x6a0] sm:$0xff]
    %v478 = vld [vmem:[%s3 + $0x6a8] sm:$0xf]
    %v479 = vld [vmem:[%s3 + $0x6ac] sm:$0xff]
    %v480 = vld [vmem:[%s3 + $0x6b4] sm:$0xff]
    %v481 = vld [vmem:[%s3 + $0x6bc] sm:$0xff]
    %v482 = vld [vmem:[%s3 + $0x6c4] sm:$0xf]
    %v483 = vld [vmem:[%s3 + $0x6c8] sm:$0xff]
    %v484 = vld [vmem:[%s3 + $0x6d0] sm:$0xff]
    %v485 = vld [vmem:[%s3 + $0x6d8] sm:$0xff]
    %v486 = vld [vmem:[%s3 + $0x6e0] sm:$0xf]
    %v487 = vld [vmem:[%s3 + $0x6e4] sm:$0xff]
    %v488 = vld [vmem:[%s3 + $0x6ec] sm:$0xff]
    %v489 = vld [vmem:[%s3 + $0x6f4] sm:$0xff]
    %v490 = vld [vmem:[%s3 + $0x6fc] sm:$0xf]
    %v491 = vld [vmem:[%s4] sm:$0x7f]
    %v493 = vlaneseq
    %v494 = vshrl.u32 %v493, 7
    %v495 = vsub.s32 0, %v494
    %v496 = vrot.slane %v491, %v495
    %v497 = vlaneseq
    %v498 = vshrl.u32 %v497, 7
    %v499 = vsub.s32 1, %v498
    %v500 = vrot.slane %v491, %v499
    %v501 = vlaneseq
    %v502 = vshrl.u32 %v501, 7
    %v503 = vsub.s32 2, %v502
    %v504 = vrot.slane %v491, %v503
    %v505 = vlaneseq
    %v506 = vshrl.u32 %v505, 7
    %v507 = vsub.s32 3, %v506
    %v508 = vrot.slane %v491, %v507
    %v509 = vlaneseq
    %v510 = vshrl.u32 %v509, 7
    %v511 = vsub.s32 4, %v510
    %v512 = vrot.slane %v491, %v511
    %v513 = vlaneseq
    %v514 = vshrl.u32 %v513, 7
    %v515 = vsub.s32 5, %v514
    %v516 = vrot.slane %v491, %v515
    %v517 = vlaneseq
    %v518 = vshrl.u32 %v517, 7
    %v519 = vsub.s32 6, %v518
    %v520 = vrot.slane %v491, %v519
    %v784 = vunpack.c.l.b16 %v235
    %v785 = vunpack.c.h.b16 %v235
    %v786 = vunpack.c.l.b16 %v236
    %v787 = vunpack.c.h.b16 %v236
    %v788 = vunpack.c.l.b16 %v237
    %v789 = vunpack.c.h.b16 %v237
    %v790 = vunpack.c.l.b16 %v238
    %v791 = vunpack.c.l.b16 %v239
    %v792 = vunpack.c.h.b16 %v239
    %v793 = vunpack.c.l.b16 %v240
    %v794 = vunpack.c.h.b16 %v240
    %v795 = vunpack.c.l.b16 %v241
    %v796 = vunpack.c.h.b16 %v241
    %v797 = vunpack.c.l.b16 %v242
    %v798 = vunpack.c.l.b16 %v243
    %v799 = vunpack.c.h.b16 %v243
    %v800 = vunpack.c.l.b16 %v244
    %v801 = vunpack.c.h.b16 %v244
    %v802 = vunpack.c.l.b16 %v245
    %v803 = vunpack.c.h.b16 %v245
    %v804 = vunpack.c.l.b16 %v246
    %v805 = vunpack.c.l.b16 %v247
    %v806 = vunpack.c.h.b16 %v247
    %v807 = vunpack.c.l.b16 %v248
    %v808 = vunpack.c.h.b16 %v248
    %v809 = vunpack.c.l.b16 %v249
    %v810 = vunpack.c.h.b16 %v249
    %v811 = vunpack.c.l.b16 %v250
    %v812 = vunpack.c.l.b16 %v251
    %v813 = vunpack.c.h.b16 %v251
    %v814 = vunpack.c.l.b16 %v252
    %v815 = vunpack.c.h.b16 %v252
    %v816 = vunpack.c.l.b16 %v253
    %v817 = vunpack.c.h.b16 %v253
    %v818 = vunpack.c.l.b16 %v254
    %v819 = vunpack.c.l.b16 %v255
    %v820 = vunpack.c.h.b16 %v255
    %v821 = vunpack.c.l.b16 %v256
    %v822 = vunpack.c.h.b16 %v256
    %v823 = vunpack.c.l.b16 %v257
    %v824 = vunpack.c.h.b16 %v257
    %v825 = vunpack.c.l.b16 %v258
    %v826 = vunpack.c.l.b16 %v259
    %v827 = vunpack.c.h.b16 %v259
    %v828 = vunpack.c.l.b16 %v260
    %v829 = vunpack.c.h.b16 %v260
    %v830 = vunpack.c.l.b16 %v261
    %v831 = vunpack.c.h.b16 %v261
    %v832 = vunpack.c.l.b16 %v262
    %v833 = vunpack.c.l.b16 %v263
    %v834 = vunpack.c.h.b16 %v263
    %v835 = vunpack.c.l.b16 %v264
    %v836 = vunpack.c.h.b16 %v264
    %v837 = vunpack.c.l.b16 %v265
    %v838 = vunpack.c.h.b16 %v265
    %v839 = vunpack.c.l.b16 %v266
    %v840 = vunpack.c.l.b16 %v267
    %v841 = vunpack.c.h.b16 %v267
    %v842 = vunpack.c.l.b16 %v268
    %v843 = vunpack.c.h.b16 %v268
    %v844 = vunpack.c.l.b16 %v269
    %v845 = vunpack.c.h.b16 %v269
    %v846 = vunpack.c.l.b16 %v270
    %v847 = vunpack.c.l.b16 %v271
    %v848 = vunpack.c.h.b16 %v271
    %v849 = vunpack.c.l.b16 %v272
    %v850 = vunpack.c.h.b16 %v272
    %v851 = vunpack.c.l.b16 %v273
    %v852 = vunpack.c.h.b16 %v273
    %v853 = vunpack.c.l.b16 %v274
    %v854 = vunpack.c.l.b16 %v275
    %v855 = vunpack.c.h.b16 %v275
    %v856 = vunpack.c.l.b16 %v276
    %v857 = vunpack.c.h.b16 %v276
    %v858 = vunpack.c.l.b16 %v277
    %v859 = vunpack.c.h.b16 %v277
    %v860 = vunpack.c.l.b16 %v278
    %v861 = vunpack.c.l.b16 %v279
    %v862 = vunpack.c.h.b16 %v279
    %v863 = vunpack.c.l.b16 %v280
    %v864 = vunpack.c.h.b16 %v280
    %v865 = vunpack.c.l.b16 %v281
    %v866 = vunpack.c.h.b16 %v281
    %v867 = vunpack.c.l.b16 %v282
    %v868 = vunpack.c.l.b16 %v283
    %v869 = vunpack.c.h.b16 %v283
    %v870 = vunpack.c.l.b16 %v284
    %v871 = vunpack.c.h.b16 %v284
    %v872 = vunpack.c.l.b16 %v285
    %v873 = vunpack.c.h.b16 %v285
    %v874 = vunpack.c.l.b16 %v286
    %v875 = vunpack.c.l.b16 %v287
    %v876 = vunpack.c.h.b16 %v287
    %v877 = vunpack.c.l.b16 %v288
    %v878 = vunpack.c.h.b16 %v288
    %v879 = vunpack.c.l.b16 %v289
    %v880 = vunpack.c.h.b16 %v289
    %v881 = vunpack.c.l.b16 %v290
    %v882 = vunpack.c.l.b16 %v291
    %v883 = vunpack.c.h.b16 %v291
    %v884 = vunpack.c.l.b16 %v292
    %v885 = vunpack.c.h.b16 %v292
    %v886 = vunpack.c.l.b16 %v293
    %v887 = vunpack.c.h.b16 %v293
    %v888 = vunpack.c.l.b16 %v294
    %v889 = vunpack.c.l.b16 %v295
    %v890 = vunpack.c.h.b16 %v295
    %v891 = vunpack.c.l.b16 %v296
    %v892 = vunpack.c.h.b16 %v296
    %v893 = vunpack.c.l.b16 %v297
    %v894 = vunpack.c.h.b16 %v297
    %v895 = vunpack.c.l.b16 %v298
    %v896 = vunpack.c.l.b16 %v299
    %v897 = vunpack.c.h.b16 %v299
    %v898 = vunpack.c.l.b16 %v300
    %v899 = vunpack.c.h.b16 %v300
    %v900 = vunpack.c.l.b16 %v301
    %v901 = vunpack.c.h.b16 %v301
    %v902 = vunpack.c.l.b16 %v302
    %v903 = vunpack.c.l.b16 %v303
    %v904 = vunpack.c.h.b16 %v303
    %v905 = vunpack.c.l.b16 %v304
    %v906 = vunpack.c.h.b16 %v304
    %v907 = vunpack.c.l.b16 %v305
    %v908 = vunpack.c.h.b16 %v305
    %v909 = vunpack.c.l.b16 %v306
    %v910 = vunpack.c.l.b16 %v307
    %v911 = vunpack.c.h.b16 %v307
    %v912 = vunpack.c.l.b16 %v308
    %v913 = vunpack.c.h.b16 %v308
    %v914 = vunpack.c.l.b16 %v309
    %v915 = vunpack.c.h.b16 %v309
    %v916 = vunpack.c.l.b16 %v310
    %v917 = vunpack.c.l.b16 %v311
    %v918 = vunpack.c.h.b16 %v311
    %v919 = vunpack.c.l.b16 %v312
    %v920 = vunpack.c.h.b16 %v312
    %v921 = vunpack.c.l.b16 %v313
    %v922 = vunpack.c.h.b16 %v313
    %v923 = vunpack.c.l.b16 %v314
    %v924 = vunpack.c.l.b16 %v315
    %v925 = vunpack.c.h.b16 %v315
    %v926 = vunpack.c.l.b16 %v316
    %v927 = vunpack.c.h.b16 %v316
    %v928 = vunpack.c.l.b16 %v317
    %v929 = vunpack.c.h.b16 %v317
    %v930 = vunpack.c.l.b16 %v318
    %v931 = vunpack.c.l.b16 %v319
    %v932 = vunpack.c.h.b16 %v319
    %v933 = vunpack.c.l.b16 %v320
    %v934 = vunpack.c.h.b16 %v320
    %v935 = vunpack.c.l.b16 %v321
    %v936 = vunpack.c.h.b16 %v321
    %v937 = vunpack.c.l.b16 %v322
    %v938 = vunpack.c.l.b16 %v323
    %v939 = vunpack.c.h.b16 %v323
    %v940 = vunpack.c.l.b16 %v324
    %v941 = vunpack.c.h.b16 %v324
    %v942 = vunpack.c.l.b16 %v325
    %v943 = vunpack.c.h.b16 %v325
    %v944 = vunpack.c.l.b16 %v326
    %v945 = vunpack.c.l.b16 %v327
    %v946 = vunpack.c.h.b16 %v327
    %v947 = vunpack.c.l.b16 %v328
    %v948 = vunpack.c.h.b16 %v328
    %v949 = vunpack.c.l.b16 %v329
    %v950 = vunpack.c.h.b16 %v329
    %v951 = vunpack.c.l.b16 %v330
    %v952 = vunpack.c.l.b16 %v331
    %v953 = vunpack.c.h.b16 %v331
    %v954 = vunpack.c.l.b16 %v332
    %v955 = vunpack.c.h.b16 %v332
    %v956 = vunpack.c.l.b16 %v333
    %v957 = vunpack.c.h.b16 %v333
    %v958 = vunpack.c.l.b16 %v334
    %v959 = vunpack.c.l.b16 %v335
    %v960 = vunpack.c.h.b16 %v335
    %v961 = vunpack.c.l.b16 %v336
    %v962 = vunpack.c.h.b16 %v336
    %v963 = vunpack.c.l.b16 %v337
    %v964 = vunpack.c.h.b16 %v337
    %v965 = vunpack.c.l.b16 %v338
    %v966 = vunpack.c.l.b16 %v339
    %v967 = vunpack.c.h.b16 %v339
    %v968 = vunpack.c.l.b16 %v340
    %v969 = vunpack.c.h.b16 %v340
    %v970 = vunpack.c.l.b16 %v341
    %v971 = vunpack.c.h.b16 %v341
    %v972 = vunpack.c.l.b16 %v342
    %v973 = vunpack.c.l.b16 %v343
    %v974 = vunpack.c.h.b16 %v343
    %v975 = vunpack.c.l.b16 %v344
    %v976 = vunpack.c.h.b16 %v344
    %v977 = vunpack.c.l.b16 %v345
    %v978 = vunpack.c.h.b16 %v345
    %v979 = vunpack.c.l.b16 %v346
    %v980 = vunpack.c.l.b16 %v347
    %v981 = vunpack.c.h.b16 %v347
    %v982 = vunpack.c.l.b16 %v348
    %v983 = vunpack.c.h.b16 %v348
    %v984 = vunpack.c.l.b16 %v349
    %v985 = vunpack.c.h.b16 %v349
    %v986 = vunpack.c.l.b16 %v350
    %v987 = vunpack.c.l.b16 %v351
    %v988 = vunpack.c.h.b16 %v351
    %v989 = vunpack.c.l.b16 %v352
    %v990 = vunpack.c.h.b16 %v352
    %v991 = vunpack.c.l.b16 %v353
    %v992 = vunpack.c.h.b16 %v353
    %v993 = vunpack.c.l.b16 %v354
    %v994 = vunpack.c.l.b16 %v355
    %v995 = vunpack.c.h.b16 %v355
    %v996 = vunpack.c.l.b16 %v356
    %v997 = vunpack.c.h.b16 %v356
    %v998 = vunpack.c.l.b16 %v357
    %v999 = vunpack.c.h.b16 %v357
    %v1000 = vunpack.c.l.b16 %v358
    %v1001 = vunpack.c.l.b16 %v359
    %v1002 = vunpack.c.h.b16 %v359
    %v1003 = vunpack.c.l.b16 %v360
    %v1004 = vunpack.c.h.b16 %v360
    %v1005 = vunpack.c.l.b16 %v361
    %v1006 = vunpack.c.h.b16 %v361
    %v1007 = vunpack.c.l.b16 %v362
    %v1008 = vunpack.c.l.b16 %v363
    %v1009 = vunpack.c.h.b16 %v363
    %v1010 = vunpack.c.l.b16 %v364
    %v1011 = vunpack.c.h.b16 %v364
    %v1012 = vunpack.c.l.b16 %v365
    %v1013 = vunpack.c.h.b16 %v365
    %v1014 = vunpack.c.l.b16 %v366
    %v1015 = vunpack.c.l.b16 %v367
    %v1016 = vunpack.c.h.b16 %v367
    %v1017 = vunpack.c.l.b16 %v368
    %v1018 = vunpack.c.h.b16 %v368
    %v1019 = vunpack.c.l.b16 %v369
    %v1020 = vunpack.c.h.b16 %v369
    %v1021 = vunpack.c.l.b16 %v370
    %v1022 = vunpack.c.l.b16 %v371
    %v1023 = vunpack.c.h.b16 %v371
    %v1024 = vunpack.c.l.b16 %v372
    %v1025 = vunpack.c.h.b16 %v372
    %v1026 = vunpack.c.l.b16 %v373
    %v1027 = vunpack.c.h.b16 %v373
    %v1028 = vunpack.c.l.b16 %v374
    %v1029 = vunpack.c.l.b16 %v375
    %v1030 = vunpack.c.h.b16 %v375
    %v1031 = vunpack.c.l.b16 %v376
    %v1032 = vunpack.c.h.b16 %v376
    %v1033 = vunpack.c.l.b16 %v377
    %v1034 = vunpack.c.h.b16 %v377
    %v1035 = vunpack.c.l.b16 %v378
    %v1036 = vunpack.c.l.b16 %v379
    %v1037 = vunpack.c.h.b16 %v379
    %v1038 = vunpack.c.l.b16 %v380
    %v1039 = vunpack.c.h.b16 %v380
    %v1040 = vunpack.c.l.b16 %v381
    %v1041 = vunpack.c.h.b16 %v381
    %v1042 = vunpack.c.l.b16 %v382
    %v1043 = vunpack.c.l.b16 %v383
    %v1044 = vunpack.c.h.b16 %v383
    %v1045 = vunpack.c.l.b16 %v384
    %v1046 = vunpack.c.h.b16 %v384
    %v1047 = vunpack.c.l.b16 %v385
    %v1048 = vunpack.c.h.b16 %v385
    %v1049 = vunpack.c.l.b16 %v386
    %v1050 = vunpack.c.l.b16 %v387
    %v1051 = vunpack.c.h.b16 %v387
    %v1052 = vunpack.c.l.b16 %v388
    %v1053 = vunpack.c.h.b16 %v388
    %v1054 = vunpack.c.l.b16 %v389
    %v1055 = vunpack.c.h.b16 %v389
    %v1056 = vunpack.c.l.b16 %v390
    %v1057 = vunpack.c.l.b16 %v391
    %v1058 = vunpack.c.h.b16 %v391
    %v1059 = vunpack.c.l.b16 %v392
    %v1060 = vunpack.c.h.b16 %v392
    %v1061 = vunpack.c.l.b16 %v393
    %v1062 = vunpack.c.h.b16 %v393
    %v1063 = vunpack.c.l.b16 %v394
    %v1064 = vunpack.c.l.b16 %v395
    %v1065 = vunpack.c.h.b16 %v395
    %v1066 = vunpack.c.l.b16 %v396
    %v1067 = vunpack.c.h.b16 %v396
    %v1068 = vunpack.c.l.b16 %v397
    %v1069 = vunpack.c.h.b16 %v397
    %v1070 = vunpack.c.l.b16 %v398
    %v1071 = vunpack.c.l.b16 %v399
    %v1072 = vunpack.c.h.b16 %v399
    %v1073 = vunpack.c.l.b16 %v400
    %v1074 = vunpack.c.h.b16 %v400
    %v1075 = vunpack.c.l.b16 %v401
    %v1076 = vunpack.c.h.b16 %v401
    %v1077 = vunpack.c.l.b16 %v402
    %v1078 = vunpack.c.l.b16 %v403
    %v1079 = vunpack.c.h.b16 %v403
    %v1080 = vunpack.c.l.b16 %v404
    %v1081 = vunpack.c.h.b16 %v404
    %v1082 = vunpack.c.l.b16 %v405
    %v1083 = vunpack.c.h.b16 %v405
    %v1084 = vunpack.c.l.b16 %v406
    %v1085 = vunpack.c.l.b16 %v407
    %v1086 = vunpack.c.h.b16 %v407
    %v1087 = vunpack.c.l.b16 %v408
    %v1088 = vunpack.c.h.b16 %v408
    %v1089 = vunpack.c.l.b16 %v409
    %v1090 = vunpack.c.h.b16 %v409
    %v1091 = vunpack.c.l.b16 %v410
    %v1092 = vunpack.c.l.b16 %v411
    %v1093 = vunpack.c.h.b16 %v411
    %v1094 = vunpack.c.l.b16 %v412
    %v1095 = vunpack.c.h.b16 %v412
    %v1096 = vunpack.c.l.b16 %v413
    %v1097 = vunpack.c.h.b16 %v413
    %v1098 = vunpack.c.l.b16 %v414
    %v1099 = vunpack.c.l.b16 %v415
    %v1100 = vunpack.c.h.b16 %v415
    %v1101 = vunpack.c.l.b16 %v416
    %v1102 = vunpack.c.h.b16 %v416
    %v1103 = vunpack.c.l.b16 %v417
    %v1104 = vunpack.c.h.b16 %v417
    %v1105 = vunpack.c.l.b16 %v418
    %v1106 = vunpack.c.l.b16 %v419
    %v1107 = vunpack.c.h.b16 %v419
    %v1108 = vunpack.c.l.b16 %v420
    %v1109 = vunpack.c.h.b16 %v420
    %v1110 = vunpack.c.l.b16 %v421
    %v1111 = vunpack.c.h.b16 %v421
    %v1112 = vunpack.c.l.b16 %v422
    %v1113 = vunpack.c.l.b16 %v423
    %v1114 = vunpack.c.h.b16 %v423
    %v1115 = vunpack.c.l.b16 %v424
    %v1116 = vunpack.c.h.b16 %v424
    %v1117 = vunpack.c.l.b16 %v425
    %v1118 = vunpack.c.h.b16 %v425
    %v1119 = vunpack.c.l.b16 %v426
    %v1120 = vunpack.c.l.b16 %v427
    %v1121 = vunpack.c.h.b16 %v427
    %v1122 = vunpack.c.l.b16 %v428
    %v1123 = vunpack.c.h.b16 %v428
    %v1124 = vunpack.c.l.b16 %v429
    %v1125 = vunpack.c.h.b16 %v429
    %v1126 = vunpack.c.l.b16 %v430
    %v1127 = vunpack.c.l.b16 %v431
    %v1128 = vunpack.c.h.b16 %v431
    %v1129 = vunpack.c.l.b16 %v432
    %v1130 = vunpack.c.h.b16 %v432
    %v1131 = vunpack.c.l.b16 %v433
    %v1132 = vunpack.c.h.b16 %v433
    %v1133 = vunpack.c.l.b16 %v434
    %v1134 = vunpack.c.l.b16 %v435
    %v1135 = vunpack.c.h.b16 %v435
    %v1136 = vunpack.c.l.b16 %v436
    %v1137 = vunpack.c.h.b16 %v436
    %v1138 = vunpack.c.l.b16 %v437
    %v1139 = vunpack.c.h.b16 %v437
    %v1140 = vunpack.c.l.b16 %v438
    %v1141 = vunpack.c.l.b16 %v439
    %v1142 = vunpack.c.h.b16 %v439
    %v1143 = vunpack.c.l.b16 %v440
    %v1144 = vunpack.c.h.b16 %v440
    %v1145 = vunpack.c.l.b16 %v441
    %v1146 = vunpack.c.h.b16 %v441
    %v1147 = vunpack.c.l.b16 %v442
    %v1148 = vunpack.c.l.b16 %v443
    %v1149 = vunpack.c.h.b16 %v443
    %v1150 = vunpack.c.l.b16 %v444
    %v1151 = vunpack.c.h.b16 %v444
    %v1152 = vunpack.c.l.b16 %v445
    %v1153 = vunpack.c.h.b16 %v445
    %v1154 = vunpack.c.l.b16 %v446
    %v1155 = vunpack.c.l.b16 %v447
    %v1156 = vunpack.c.h.b16 %v447
    %v1157 = vunpack.c.l.b16 %v448
    %v1158 = vunpack.c.h.b16 %v448
    %v1159 = vunpack.c.l.b16 %v449
    %v1160 = vunpack.c.h.b16 %v449
    %v1161 = vunpack.c.l.b16 %v450
    %v1162 = vunpack.c.l.b16 %v451
    %v1163 = vunpack.c.h.b16 %v451
    %v1164 = vunpack.c.l.b16 %v452
    %v1165 = vunpack.c.h.b16 %v452
    %v1166 = vunpack.c.l.b16 %v453
    %v1167 = vunpack.c.h.b16 %v453
    %v1168 = vunpack.c.l.b16 %v454
    %v1169 = vunpack.c.l.b16 %v455
    %v1170 = vunpack.c.h.b16 %v455
    %v1171 = vunpack.c.l.b16 %v456
    %v1172 = vunpack.c.h.b16 %v456
    %v1173 = vunpack.c.l.b16 %v457
    %v1174 = vunpack.c.h.b16 %v457
    %v1175 = vunpack.c.l.b16 %v458
    %v1176 = vunpack.c.l.b16 %v459
    %v1177 = vunpack.c.h.b16 %v459
    %v1178 = vunpack.c.l.b16 %v460
    %v1179 = vunpack.c.h.b16 %v460
    %v1180 = vunpack.c.l.b16 %v461
    %v1181 = vunpack.c.h.b16 %v461
    %v1182 = vunpack.c.l.b16 %v462
    %v1183 = vunpack.c.l.b16 %v463
    %v1184 = vunpack.c.h.b16 %v463
    %v1185 = vunpack.c.l.b16 %v464
    %v1186 = vunpack.c.h.b16 %v464
    %v1187 = vunpack.c.l.b16 %v465
    %v1188 = vunpack.c.h.b16 %v465
    %v1189 = vunpack.c.l.b16 %v466
    %v1190 = vunpack.c.l.b16 %v467
    %v1191 = vunpack.c.h.b16 %v467
    %v1192 = vunpack.c.l.b16 %v468
    %v1193 = vunpack.c.h.b16 %v468
    %v1194 = vunpack.c.l.b16 %v469
    %v1195 = vunpack.c.h.b16 %v469
    %v1196 = vunpack.c.l.b16 %v470
    %v1197 = vunpack.c.l.b16 %v471
    %v1198 = vunpack.c.h.b16 %v471
    %v1199 = vunpack.c.l.b16 %v472
    %v1200 = vunpack.c.h.b16 %v472
    %v1201 = vunpack.c.l.b16 %v473
    %v1202 = vunpack.c.h.b16 %v473
    %v1203 = vunpack.c.l.b16 %v474
    %v1204 = vunpack.c.l.b16 %v475
    %v1205 = vunpack.c.h.b16 %v475
    %v1206 = vunpack.c.l.b16 %v476
    %v1207 = vunpack.c.h.b16 %v476
    %v1208 = vunpack.c.l.b16 %v477
    %v1209 = vunpack.c.h.b16 %v477
    %v1210 = vunpack.c.l.b16 %v478
    %v1211 = vunpack.c.l.b16 %v479
    %v1212 = vunpack.c.h.b16 %v479
    %v1213 = vunpack.c.l.b16 %v480
    %v1214 = vunpack.c.h.b16 %v480
    %v1215 = vunpack.c.l.b16 %v481
    %v1216 = vunpack.c.h.b16 %v481
    %v1217 = vunpack.c.l.b16 %v482
    %v1218 = vunpack.c.l.b16 %v483
    %v1219 = vunpack.c.h.b16 %v483
    %v1220 = vunpack.c.l.b16 %v484
    %v1221 = vunpack.c.h.b16 %v484
    %v1222 = vunpack.c.l.b16 %v485
    %v1223 = vunpack.c.h.b16 %v485
    %v1224 = vunpack.c.l.b16 %v486
    %v1225 = vunpack.c.l.b16 %v487
    %v1226 = vunpack.c.h.b16 %v487
    %v1227 = vunpack.c.l.b16 %v488
    %v1228 = vunpack.c.h.b16 %v488
    %v1229 = vunpack.c.l.b16 %v489
    %v1230 = vunpack.c.h.b16 %v489
    %v1231 = vunpack.c.l.b16 %v490
    %v1232 = vpack.c.b16 %v791, %v784
    %v1233 = vpack.c.b16 %v792, %v785
    %v1234 = vpack.c.b16 %v793, %v786
    %v1235 = vpack.c.b16 %v794, %v787
    %v1236 = vpack.c.b16 %v795, %v788
    %v1237 = vpack.c.b16 %v796, %v789
    %v1238 = vpack.c.b16 %v797, %v790
    %v1239 = vpack.c.b16 %v805, %v798
    %v1240 = vpack.c.b16 %v806, %v799
    %v1241 = vpack.c.b16 %v807, %v800
    %v1242 = vpack.c.b16 %v808, %v801
    %v1243 = vpack.c.b16 %v809, %v802
    %v1244 = vpack.c.b16 %v810, %v803
    %v1245 = vpack.c.b16 %v811, %v804
    %v1246 = vpack.c.b16 %v819, %v812
    %v1247 = vpack.c.b16 %v820, %v813
    %v1248 = vpack.c.b16 %v821, %v814
    %v1249 = vpack.c.b16 %v822, %v815
    %v1250 = vpack.c.b16 %v823, %v816
    %v1251 = vpack.c.b16 %v824, %v817
    %v1252 = vpack.c.b16 %v825, %v818
    %v1253 = vpack.c.b16 %v833, %v826
    %v1254 = vpack.c.b16 %v834, %v827
    %v1255 = vpack.c.b16 %v835, %v828
    %v1256 = vpack.c.b16 %v836, %v829
    %v1257 = vpack.c.b16 %v837, %v830
    %v1258 = vpack.c.b16 %v838, %v831
    %v1259 = vpack.c.b16 %v839, %v832
    %v1260 = vpack.c.b16 %v847, %v840
    %v1261 = vpack.c.b16 %v848, %v841
    %v1262 = vpack.c.b16 %v849, %v842
    %v1263 = vpack.c.b16 %v850, %v843
    %v1264 = vpack.c.b16 %v851, %v844
    %v1265 = vpack.c.b16 %v852, %v845
    %v1266 = vpack.c.b16 %v853, %v846
    %v1267 = vpack.c.b16 %v861, %v854
    %v1268 = vpack.c.b16 %v862, %v855
    %v1269 = vpack.c.b16 %v863, %v856
    %v1270 = vpack.c.b16 %v864, %v857
    %v1271 = vpack.c.b16 %v865, %v858
    %v1272 = vpack.c.b16 %v866, %v859
    %v1273 = vpack.c.b16 %v867, %v860
    %v1274 = vpack.c.b16 %v875, %v868
    %v1275 = vpack.c.b16 %v876, %v869
    %v1276 = vpack.c.b16 %v877, %v870
    %v1277 = vpack.c.b16 %v878, %v871
    %v1278 = vpack.c.b16 %v879, %v872
    %v1279 = vpack.c.b16 %v880, %v873
    %v1280 = vpack.c.b16 %v881, %v874
    %v1281 = vpack.c.b16 %v889, %v882
    %v1282 = vpack.c.b16 %v890, %v883
    %v1283 = vpack.c.b16 %v891, %v884
    %v1284 = vpack.c.b16 %v892, %v885
    %v1285 = vpack.c.b16 %v893, %v886
    %v1286 = vpack.c.b16 %v894, %v887
    %v1287 = vpack.c.b16 %v895, %v888
    %v1288 = vpack.c.b16 %v903, %v896
    %v1289 = vpack.c.b16 %v904, %v897
    %v1290 = vpack.c.b16 %v905, %v898
    %v1291 = vpack.c.b16 %v906, %v899
    %v1292 = vpack.c.b16 %v907, %v900
    %v1293 = vpack.c.b16 %v908, %v901
    %v1294 = vpack.c.b16 %v909, %v902
    %v1295 = vpack.c.b16 %v917, %v910
    %v1296 = vpack.c.b16 %v918, %v911
    %v1297 = vpack.c.b16 %v919, %v912
    %v1298 = vpack.c.b16 %v920, %v913
    %v1299 = vpack.c.b16 %v921, %v914
    %v1300 = vpack.c.b16 %v922, %v915
    %v1301 = vpack.c.b16 %v923, %v916
    %v1302 = vpack.c.b16 %v931, %v924
    %v1303 = vpack.c.b16 %v932, %v925
    %v1304 = vpack.c.b16 %v933, %v926
    %v1305 = vpack.c.b16 %v934, %v927
    %v1306 = vpack.c.b16 %v935, %v928
    %v1307 = vpack.c.b16 %v936, %v929
    %v1308 = vpack.c.b16 %v937, %v930
    %v1309 = vpack.c.b16 %v945, %v938
    %v1310 = vpack.c.b16 %v946, %v939
    %v1311 = vpack.c.b16 %v947, %v940
    %v1312 = vpack.c.b16 %v948, %v941
    %v1313 = vpack.c.b16 %v949, %v942
    %v1314 = vpack.c.b16 %v950, %v943
    %v1315 = vpack.c.b16 %v951, %v944
    %v1316 = vpack.c.b16 %v959, %v952
    %v1317 = vpack.c.b16 %v960, %v953
    %v1318 = vpack.c.b16 %v961, %v954
    %v1319 = vpack.c.b16 %v962, %v955
    %v1320 = vpack.c.b16 %v963, %v956
    %v1321 = vpack.c.b16 %v964, %v957
    %v1322 = vpack.c.b16 %v965, %v958
    %v1323 = vpack.c.b16 %v973, %v966
    %v1324 = vpack.c.b16 %v974, %v967
    %v1325 = vpack.c.b16 %v975, %v968
    %v1326 = vpack.c.b16 %v976, %v969
    %v1327 = vpack.c.b16 %v977, %v970
    %v1328 = vpack.c.b16 %v978, %v971
    %v1329 = vpack.c.b16 %v979, %v972
    %v1330 = vpack.c.b16 %v987, %v980
    %v1331 = vpack.c.b16 %v988, %v981
    %v1332 = vpack.c.b16 %v989, %v982
    %v1333 = vpack.c.b16 %v990, %v983
    %v1334 = vpack.c.b16 %v991, %v984
    %v1335 = vpack.c.b16 %v992, %v985
    %v1336 = vpack.c.b16 %v993, %v986
    %v1337 = vpack.c.b16 %v1001, %v994
    %v1338 = vpack.c.b16 %v1002, %v995
    %v1339 = vpack.c.b16 %v1003, %v996
    %v1340 = vpack.c.b16 %v1004, %v997
    %v1341 = vpack.c.b16 %v1005, %v998
    %v1342 = vpack.c.b16 %v1006, %v999
    %v1343 = vpack.c.b16 %v1007, %v1000
    %v1344 = vpack.c.b16 %v1015, %v1008
    %v1345 = vpack.c.b16 %v1016, %v1009
    %v1346 = vpack.c.b16 %v1017, %v1010
    %v1347 = vpack.c.b16 %v1018, %v1011
    %v1348 = vpack.c.b16 %v1019, %v1012
    %v1349 = vpack.c.b16 %v1020, %v1013
    %v1350 = vpack.c.b16 %v1021, %v1014
    %v1351 = vpack.c.b16 %v1029, %v1022
    %v1352 = vpack.c.b16 %v1030, %v1023
    %v1353 = vpack.c.b16 %v1031, %v1024
    %v1354 = vpack.c.b16 %v1032, %v1025
    %v1355 = vpack.c.b16 %v1033, %v1026
    %v1356 = vpack.c.b16 %v1034, %v1027
    %v1357 = vpack.c.b16 %v1035, %v1028
    %v1358 = vpack.c.b16 %v1043, %v1036
    %v1359 = vpack.c.b16 %v1044, %v1037
    %v1360 = vpack.c.b16 %v1045, %v1038
    %v1361 = vpack.c.b16 %v1046, %v1039
    %v1362 = vpack.c.b16 %v1047, %v1040
    %v1363 = vpack.c.b16 %v1048, %v1041
    %v1364 = vpack.c.b16 %v1049, %v1042
    %v1365 = vpack.c.b16 %v1057, %v1050
    %v1366 = vpack.c.b16 %v1058, %v1051
    %v1367 = vpack.c.b16 %v1059, %v1052
    %v1368 = vpack.c.b16 %v1060, %v1053
    %v1369 = vpack.c.b16 %v1061, %v1054
    %v1370 = vpack.c.b16 %v1062, %v1055
    %v1371 = vpack.c.b16 %v1063, %v1056
    %v1372 = vpack.c.b16 %v1071, %v1064
    %v1373 = vpack.c.b16 %v1072, %v1065
    %v1374 = vpack.c.b16 %v1073, %v1066
    %v1375 = vpack.c.b16 %v1074, %v1067
    %v1376 = vpack.c.b16 %v1075, %v1068
    %v1377 = vpack.c.b16 %v1076, %v1069
    %v1378 = vpack.c.b16 %v1077, %v1070
    %v1379 = vpack.c.b16 %v1085, %v1078
    %v1380 = vpack.c.b16 %v1086, %v1079
    %v1381 = vpack.c.b16 %v1087, %v1080
    %v1382 = vpack.c.b16 %v1088, %v1081
    %v1383 = vpack.c.b16 %v1089, %v1082
    %v1384 = vpack.c.b16 %v1090, %v1083
    %v1385 = vpack.c.b16 %v1091, %v1084
    %v1386 = vpack.c.b16 %v1099, %v1092
    %v1387 = vpack.c.b16 %v1100, %v1093
    %v1388 = vpack.c.b16 %v1101, %v1094
    %v1389 = vpack.c.b16 %v1102, %v1095
    %v1390 = vpack.c.b16 %v1103, %v1096
    %v1391 = vpack.c.b16 %v1104, %v1097
    %v1392 = vpack.c.b16 %v1105, %v1098
    %v1393 = vpack.c.b16 %v1113, %v1106
    %v1394 = vpack.c.b16 %v1114, %v1107
    %v1395 = vpack.c.b16 %v1115, %v1108
    %v1396 = vpack.c.b16 %v1116, %v1109
    %v1397 = vpack.c.b16 %v1117, %v1110
    %v1398 = vpack.c.b16 %v1118, %v1111
    %v1399 = vpack.c.b16 %v1119, %v1112
    %v1400 = vpack.c.b16 %v1127, %v1120
    %v1401 = vpack.c.b16 %v1128, %v1121
    %v1402 = vpack.c.b16 %v1129, %v1122
    %v1403 = vpack.c.b16 %v1130, %v1123
    %v1404 = vpack.c.b16 %v1131, %v1124
    %v1405 = vpack.c.b16 %v1132, %v1125
    %v1406 = vpack.c.b16 %v1133, %v1126
    %v1407 = vpack.c.b16 %v1141, %v1134
    %v1408 = vpack.c.b16 %v1142, %v1135
    %v1409 = vpack.c.b16 %v1143, %v1136
    %v1410 = vpack.c.b16 %v1144, %v1137
    %v1411 = vpack.c.b16 %v1145, %v1138
    %v1412 = vpack.c.b16 %v1146, %v1139
    %v1413 = vpack.c.b16 %v1147, %v1140
    %v1414 = vpack.c.b16 %v1155, %v1148
    %v1415 = vpack.c.b16 %v1156, %v1149
    %v1416 = vpack.c.b16 %v1157, %v1150
    %v1417 = vpack.c.b16 %v1158, %v1151
    %v1418 = vpack.c.b16 %v1159, %v1152
    %v1419 = vpack.c.b16 %v1160, %v1153
    %v1420 = vpack.c.b16 %v1161, %v1154
    %v1421 = vpack.c.b16 %v1169, %v1162
    %v1422 = vpack.c.b16 %v1170, %v1163
    %v1423 = vpack.c.b16 %v1171, %v1164
    %v1424 = vpack.c.b16 %v1172, %v1165
    %v1425 = vpack.c.b16 %v1173, %v1166
    %v1426 = vpack.c.b16 %v1174, %v1167
    %v1427 = vpack.c.b16 %v1175, %v1168
    %v1428 = vpack.c.b16 %v1183, %v1176
    %v1429 = vpack.c.b16 %v1184, %v1177
    %v1430 = vpack.c.b16 %v1185, %v1178
    %v1431 = vpack.c.b16 %v1186, %v1179
    %v1432 = vpack.c.b16 %v1187, %v1180
    %v1433 = vpack.c.b16 %v1188, %v1181
    %v1434 = vpack.c.b16 %v1189, %v1182
    %v1435 = vpack.c.b16 %v1197, %v1190
    %v1436 = vpack.c.b16 %v1198, %v1191
    %v1437 = vpack.c.b16 %v1199, %v1192
    %v1438 = vpack.c.b16 %v1200, %v1193
    %v1439 = vpack.c.b16 %v1201, %v1194
    %v1440 = vpack.c.b16 %v1202, %v1195
    %v1441 = vpack.c.b16 %v1203, %v1196
    %v1442 = vpack.c.b16 %v1211, %v1204
    %v1443 = vpack.c.b16 %v1212, %v1205
    %v1444 = vpack.c.b16 %v1213, %v1206
    %v1445 = vpack.c.b16 %v1214, %v1207
    %v1446 = vpack.c.b16 %v1215, %v1208
    %v1447 = vpack.c.b16 %v1216, %v1209
    %v1448 = vpack.c.b16 %v1217, %v1210
    %v1449 = vpack.c.b16 %v1225, %v1218
    %v1450 = vpack.c.b16 %v1226, %v1219
    %v1451 = vpack.c.b16 %v1227, %v1220
    %v1452 = vpack.c.b16 %v1228, %v1221
    %v1453 = vpack.c.b16 %v1229, %v1222
    %v1454 = vpack.c.b16 %v1230, %v1223
    %v1455 = vpack.c.b16 %v1231, %v1224
    %1680 = vmatprep.subr.bf16.mxu0 %v1233
    %1681 = vmatpush1.bf16.msra.mxu0 %v1232
    %1682 = vmatprep.subr.bf16.mxu0 %v1240
    %1683 = vmatpush1.bf16.msra.mxu0 %v1239
    %1684 = vmatprep.subr.bf16.mxu0 %v1247
    %1685 = vmatpush1.bf16.msra.mxu0 %v1246
    %1686 = vmatprep.subr.bf16.mxu0 %v1254
    %1687 = vmatpush1.bf16.msra.mxu0 %v1253
    %1688 = vmatprep.subr.bf16.mxu0 %v1261
    %1689 = vmatpush1.bf16.msra.mxu0 %v1260
    %1690 = vmatprep.subr.bf16.mxu0 %v1268
    %1691 = vmatpush1.bf16.msra.mxu0 %v1267
    %1692 = vmatprep.subr.bf16.mxu0 %v1275
    %1693 = vmatpush1.bf16.msra.mxu0 %v1274
    %1694 = vmatprep.subr.bf16.mxu0 %v1282
    %1695 = vmatpush1.bf16.msra.mxu0 %v1281
    %1696 = vmatprep.subr.bf16.mxu0 %v1289
    %1697 = vmatpush1.bf16.msra.mxu0 %v1288
    %1698 = vmatprep.subr.bf16.mxu0 %v1296
    %1699 = vmatpush1.bf16.msra.mxu0 %v1295
    %1700 = vmatprep.subr.bf16.mxu0 %v1303
    %1701 = vmatpush1.bf16.msra.mxu0 %v1302
    %1702 = vmatprep.subr.bf16.mxu0 %v1310
    %1703 = vmatpush1.bf16.msra.mxu0 %v1309
    %1704 = vmatprep.subr.bf16.mxu0 %v1317
    %1705 = vmatpush1.bf16.msra.mxu0 %v1316
    %1706 = vmatprep.subr.bf16.mxu0 %v1324
    %1707 = vmatpush1.bf16.msra.mxu0 %v1323
    %1708 = vmatprep.subr.bf16.mxu0 %v1331
    %1709 = vmatpush1.bf16.msra.mxu0 %v1330
    %1710 = vmatprep.subr.bf16.mxu0 %v1338
    %1711 = vmatpush1.bf16.msra.mxu0 %v1337
    %1712 = vmatprep.mubr.bf16.mxu0 %v232
    %1713 = vmatmul.mubr.bf16.gmra.mrb[0].mxu0 %v231
    %v1714 = vpop.f32.mrb[0].mxu0
    %v1715 = vadd.f32 %v496, %v1714
    %v1716 = vpop.f32.mrb[0].mxu0
    %v1717 = vadd.f32 %v500, %v1716
    %v1718 = vpop.f32.mrb[0].mxu0
    %v1719 = vpop.f32.mrb[0].mxu0
    %1720 = vdwg.mxu0
    %1721 = vmatprep.subr.bf16.mxu0 %v1345
    %1722 = vmatpush1.bf16.msra.mxu0 %v1344
    %1723 = vmatprep.subr.bf16.mxu0 %v1352
    %1724 = vmatpush1.bf16.msra.mxu0 %v1351
    %1725 = vmatprep.subr.bf16.mxu0 %v1359
    %1726 = vmatpush1.bf16.msra.mxu0 %v1358
    %1727 = vmatprep.subr.bf16.mxu0 %v1366
    %1728 = vmatpush1.bf16.msra.mxu0 %v1365
    %1729 = vmatprep.subr.bf16.mxu0 %v1373
    %1730 = vmatpush1.bf16.msra.mxu0 %v1372
    %1731 = vmatprep.subr.bf16.mxu0 %v1380
    %1732 = vmatpush1.bf16.msra.mxu0 %v1379
    %1733 = vmatprep.subr.bf16.mxu0 %v1387
    %1734 = vmatpush1.bf16.msra.mxu0 %v1386
    %1735 = vmatprep.subr.bf16.mxu0 %v1394
    %1736 = vmatpush1.bf16.msra.mxu0 %v1393
    %1737 = vmatprep.subr.bf16.mxu0 %v1401
    %1738 = vmatpush1.bf16.msra.mxu0 %v1400
    %1739 = vmatprep.subr.bf16.mxu0 %v1408
    %1740 = vmatpush1.bf16.msra.mxu0 %v1407
    %1741 = vmatprep.subr.bf16.mxu0 %v1415
    %1742 = vmatpush1.bf16.msra.mxu0 %v1414
    %1743 = vmatprep.subr.bf16.mxu0 %v1422
    %1744 = vmatpush1.bf16.msra.mxu0 %v1421
    %1745 = vmatprep.subr.bf16.mxu0 %v1429
    %1746 = vmatpush1.bf16.msra.mxu0 %v1428
    %1747 = vmatprep.subr.bf16.mxu0 %v1436
    %1748 = vmatpush1.bf16.msra.mxu0 %v1435
    %1749 = vmatprep.subr.bf16.mxu0 %v1443
    %1750 = vmatpush1.bf16.msra.mxu0 %v1442
    %1751 = vmatprep.subr.bf16.mxu0 %v1450
    %1752 = vmatpush1.bf16.msra.mxu0 %v1449
    %1753 = vmatprep.mubr.bf16.mxu0 %v234
    %1754 = vmatmul.mubr.bf16.gmra.mrb[0].mxu0 %v233
    %v1755 = vpop.f32.mrb[0].mxu0
    %v1756 = vadd.f32 %v1715, %v1755
    %v1757 = vpop.f32.mrb[0].mxu0
    %v1758 = vadd.f32 %v1717, %v1757
    %v1759 = vpop.f32.mrb[0].mxu0
    %v1760 = vpop.f32.mrb[0].mxu0
    %1761 = vdwg.mxu0
    %1762 = vmatprep.subr.bf16.mxu0 %v1235
    %1763 = vmatpush1.bf16.msra.mxu0 %v1234
    %1764 = vmatprep.subr.bf16.mxu0 %v1242
    %1765 = vmatpush1.bf16.msra.mxu0 %v1241
    %1766 = vmatprep.subr.bf16.mxu0 %v1249
    %1767 = vmatpush1.bf16.msra.mxu0 %v1248
    %1768 = vmatprep.subr.bf16.mxu0 %v1256
    %1769 = vmatpush1.bf16.msra.mxu0 %v1255
    %1770 = vmatprep.subr.bf16.mxu0 %v1263
    %1771 = vmatpush1.bf16.msra.mxu0 %v1262
    %1772 = vmatprep.subr.bf16.mxu0 %v1270
    %1773 = vmatpush1.bf16.msra.mxu0 %v1269
    %1774 = vmatprep.subr.bf16.mxu0 %v1277
    %1775 = vmatpush1.bf16.msra.mxu0 %v1276
    %1776 = vmatprep.subr.bf16.mxu0 %v1284
    %1777 = vmatpush1.bf16.msra.mxu0 %v1283
    %1778 = vmatprep.subr.bf16.mxu0 %v1291
    %1779 = vmatpush1.bf16.msra.mxu0 %v1290
    %1780 = vmatprep.subr.bf16.mxu0 %v1298
    %1781 = vmatpush1.bf16.msra.mxu0 %v1297
    %1782 = vmatprep.subr.bf16.mxu0 %v1305
    %1783 = vmatpush1.bf16.msra.mxu0 %v1304
    %1784 = vmatprep.subr.bf16.mxu0 %v1312
    %1785 = vmatpush1.bf16.msra.mxu0 %v1311
    %1786 = vmatprep.subr.bf16.mxu0 %v1319
    %1787 = vmatpush1.bf16.msra.mxu0 %v1318
    %1788 = vmatprep.subr.bf16.mxu0 %v1326
    %1789 = vmatpush1.bf16.msra.mxu0 %v1325
    %1790 = vmatprep.subr.bf16.mxu0 %v1333
    %1791 = vmatpush1.bf16.msra.mxu0 %v1332
    %1792 = vmatprep.subr.bf16.mxu0 %v1340
    %1793 = vmatpush1.bf16.msra.mxu0 %v1339
    %1794 = vmatprep.mubr.bf16.mxu0 %v232
    %1795 = vmatmul.mubr.bf16.gmra.mrb[0].mxu0 %v231
    %v1796 = vpop.f32.mrb[0].mxu0
    %v1797 = vadd.f32 %v504, %v1796
    %v1798 = vpop.f32.mrb[0].mxu0
    %v1799 = vadd.f32 %v508, %v1798
    %v1800 = vpop.f32.mrb[0].mxu0
    %v1801 = vpop.f32.mrb[0].mxu0
    %1802 = vdwg.mxu0
    %1803 = vmatprep.subr.bf16.mxu0 %v1347
    %1804 = vmatpush1.bf16.msra.mxu0 %v1346
    %1805 = vmatprep.subr.bf16.mxu0 %v1354
    %1806 = vmatpush1.bf16.msra.mxu0 %v1353
    %1807 = vmatprep.subr.bf16.mxu0 %v1361
    %1808 = vmatpush1.bf16.msra.mxu0 %v1360
    %1809 = vmatprep.subr.bf16.mxu0 %v1368
    %1810 = vmatpush1.bf16.msra.mxu0 %v1367
    %1811 = vmatprep.subr.bf16.mxu0 %v1375
    %1812 = vmatpush1.bf16.msra.mxu0 %v1374
    %1813 = vmatprep.subr.bf16.mxu0 %v1382
    %1814 = vmatpush1.bf16.msra.mxu0 %v1381
    %1815 = vmatprep.subr.bf16.mxu0 %v1389
    %1816 = vmatpush1.bf16.msra.mxu0 %v1388
    %1817 = vmatprep.subr.bf16.mxu0 %v1396
    %1818 = vmatpush1.bf16.msra.mxu0 %v1395
    %1819 = vmatprep.subr.bf16.mxu0 %v1403
    %1820 = vmatpush1.bf16.msra.mxu0 %v1402
    %1821 = vmatprep.subr.bf16.mxu0 %v1410
    %1822 = vmatpush1.bf16.msra.mxu0 %v1409
    %1823 = vmatprep.subr.bf16.mxu0 %v1417
    %1824 = vmatpush1.bf16.msra.mxu0 %v1416
    %1825 = vmatprep.subr.bf16.mxu0 %v1424
    %1826 = vmatpush1.bf16.msra.mxu0 %v1423
    %1827 = vmatprep.subr.bf16.mxu0 %v1431
    %1828 = vmatpush1.bf16.msra.mxu0 %v1430
    %1829 = vmatprep.subr.bf16.mxu0 %v1438
    %1830 = vmatpush1.bf16.msra.mxu0 %v1437
    %1831 = vmatprep.subr.bf16.mxu0 %v1445
    %1832 = vmatpush1.bf16.msra.mxu0 %v1444
    %1833 = vmatprep.subr.bf16.mxu0 %v1452
    %1834 = vmatpush1.bf16.msra.mxu0 %v1451
    %1835 = vmatprep.mubr.bf16.mxu0 %v234
    %1836 = vmatmul.mubr.bf16.gmra.mrb[0].mxu0 %v233
    %v1837 = vpop.f32.mrb[0].mxu0
    %v1838 = vadd.f32 %v1797, %v1837
    %v1839 = vpop.f32.mrb[0].mxu0
    %v1840 = vadd.f32 %v1799, %v1839
    %v1841 = vpop.f32.mrb[0].mxu0
    %v1842 = vpop.f32.mrb[0].mxu0
    %1843 = vdwg.mxu0
    %1844 = vmatprep.subr.bf16.mxu0 %v1237
    %1845 = vmatpush1.bf16.msra.mxu0 %v1236
    %1846 = vmatprep.subr.bf16.mxu0 %v1244
    %1847 = vmatpush1.bf16.msra.mxu0 %v1243
    %1848 = vmatprep.subr.bf16.mxu0 %v1251
    %1849 = vmatpush1.bf16.msra.mxu0 %v1250
    %1850 = vmatprep.subr.bf16.mxu0 %v1258
    %1851 = vmatpush1.bf16.msra.mxu0 %v1257
    %1852 = vmatprep.subr.bf16.mxu0 %v1265
    %1853 = vmatpush1.bf16.msra.mxu0 %v1264
    %1854 = vmatprep.subr.bf16.mxu0 %v1272
    %1855 = vmatpush1.bf16.msra.mxu0 %v1271
    %1856 = vmatprep.subr.bf16.mxu0 %v1279
    %1857 = vmatpush1.bf16.msra.mxu0 %v1278
    %1858 = vmatprep.subr.bf16.mxu0 %v1286
    %1859 = vmatpush1.bf16.msra.mxu0 %v1285
    %1860 = vmatprep.subr.bf16.mxu0 %v1293
    %1861 = vmatpush1.bf16.msra.mxu0 %v1292
    %1862 = vmatprep.subr.bf16.mxu0 %v1300
    %1863 = vmatpush1.bf16.msra.mxu0 %v1299
    %1864 = vmatprep.subr.bf16.mxu0 %v1307
    %1865 = vmatpush1.bf16.msra.mxu0 %v1306
    %1866 = vmatprep.subr.bf16.mxu0 %v1314
    %1867 = vmatpush1.bf16.msra.mxu0 %v1313
    %1868 = vmatprep.subr.bf16.mxu0 %v1321
    %1869 = vmatpush1.bf16.msra.mxu0 %v1320
    %1870 = vmatprep.subr.bf16.mxu0 %v1328
    %1871 = vmatpush1.bf16.msra.mxu0 %v1327
    %1872 = vmatprep.subr.bf16.mxu0 %v1335
    %1873 = vmatpush1.bf16.msra.mxu0 %v1334
    %1874 = vmatprep.subr.bf16.mxu0 %v1342
    %1875 = vmatpush1.bf16.msra.mxu0 %v1341
    %1876 = vmatprep.mubr.bf16.mxu0 %v232
    %1877 = vmatmul.mubr.bf16.gmra.mrb[0].mxu0 %v231
    %v1878 = vpop.f32.mrb[0].mxu0
    %v1879 = vadd.f32 %v512, %v1878
    %v1880 = vpop.f32.mrb[0].mxu0
    %v1881 = vadd.f32 %v516, %v1880
    %v1882 = vpop.f32.mrb[0].mxu0
    %v1883 = vpop.f32.mrb[0].mxu0
    %1884 = vdwg.mxu0
    %1885 = vmatprep.subr.bf16.mxu0 %v1349
    %1886 = vmatpush1.bf16.msra.mxu0 %v1348
    %1887 = vmatprep.subr.bf16.mxu0 %v1356
    %1888 = vmatpush1.bf16.msra.mxu0 %v1355
    %1889 = vmatprep.subr.bf16.mxu0 %v1363
    %1890 = vmatpush1.bf16.msra.mxu0 %v1362
    %1891 = vmatprep.subr.bf16.mxu0 %v1370
    %1892 = vmatpush1.bf16.msra.mxu0 %v1369
    %1893 = vmatprep.subr.bf16.mxu0 %v1377
    %1894 = vmatpush1.bf16.msra.mxu0 %v1376
    %1895 = vmatprep.subr.bf16.mxu0 %v1384
    %1896 = vmatpush1.bf16.msra.mxu0 %v1383
    %1897 = vmatprep.subr.bf16.mxu0 %v1391
    %1898 = vmatpush1.bf16.msra.mxu0 %v1390
    %1899 = vmatprep.subr.bf16.mxu0 %v1398
    %1900 = vmatpush1.bf16.msra.mxu0 %v1397
    %1901 = vmatprep.subr.bf16.mxu0 %v1405
    %1902 = vmatpush1.bf16.msra.mxu0 %v1404
    %1903 = vmatprep.subr.bf16.mxu0 %v1412
    %1904 = vmatpush1.bf16.msra.mxu0 %v1411
    %1905 = vmatprep.subr.bf16.mxu0 %v1419
    %1906 = vmatpush1.bf16.msra.mxu0 %v1418
    %1907 = vmatprep.subr.bf16.mxu0 %v1426
    %1908 = vmatpush1.bf16.msra.mxu0 %v1425
    %1909 = vmatprep.subr.bf16.mxu0 %v1433
    %1910 = vmatpush1.bf16.msra.mxu0 %v1432
    %1911 = vmatprep.subr.bf16.mxu0 %v1440
    %1912 = vmatpush1.bf16.msra.mxu0 %v1439
    %1913 = vmatprep.subr.bf16.mxu0 %v1447
    %1914 = vmatpush1.bf16.msra.mxu0 %v1446
    %1915 = vmatprep.subr.bf16.mxu0 %v1454
    %1916 = vmatpush1.bf16.msra.mxu0 %v1453
    %1917 = vmatprep.mubr.bf16.mxu0 %v234
    %1918 = vmatmul.mubr.bf16.gmra.mrb[0].mxu0 %v233
    %v1919 = vpop.f32.mrb[0].mxu0
    %v1920 = vadd.f32 %v1879, %v1919
    %v1921 = vpop.f32.mrb[0].mxu0
    %v1922 = vadd.f32 %v1881, %v1921
    %v1923 = vpop.f32.mrb[0].mxu0
    %v1924 = vpop.f32.mrb[0].mxu0
    %1925 = vdwg.mxu0
    %1926 = vmatprep.subr.bf16.mxu0 0
    %1927 = vmatpush1.bf16.msra.mxu0 %v1238
    %1928 = vmatprep.subr.bf16.mxu0 0
    %1929 = vmatpush1.bf16.msra.mxu0 %v1245
    %1930 = vmatprep.subr.bf16.mxu0 0
    %1931 = vmatpush1.bf16.msra.mxu0 %v1252
    %1932 = vmatprep.subr.bf16.mxu0 0
    %1933 = vmatpush1.bf16.msra.mxu0 %v1259
    %1934 = vmatprep.subr.bf16.mxu0 0
    %1935 = vmatpush1.bf16.msra.mxu0 %v1266
    %1936 = vmatprep.subr.bf16.mxu0 0
    %1937 = vmatpush1.bf16.msra.mxu0 %v1273
    %1938 = vmatprep.subr.bf16.mxu0 0
    %1939 = vmatpush1.bf16.msra.mxu0 %v1280
    %1940 = vmatprep.subr.bf16.mxu0 0
    %1941 = vmatpush1.bf16.msra.mxu0 %v1287
    %1942 = vmatprep.subr.bf16.mxu0 0
    %1943 = vmatpush1.bf16.msra.mxu0 %v1294
    %1944 = vmatprep.subr.bf16.mxu0 0
    %1945 = vmatpush1.bf16.msra.mxu0 %v1301
    %1946 = vmatprep.subr.bf16.mxu0 0
    %1947 = vmatpush1.bf16.msra.mxu0 %v1308
    %1948 = vmatprep.subr.bf16.mxu0 0
    %1949 = vmatpush1.bf16.msra.mxu0 %v1315
    %1950 = vmatprep.subr.bf16.mxu0 0
    %1951 = vmatpush1.bf16.msra.mxu0 %v1322
    %1952 = vmatprep.subr.bf16.mxu0 0
    %1953 = vmatpush1.bf16.msra.mxu0 %v1329
    %1954 = vmatprep.subr.bf16.mxu0 0
    %1955 = vmatpush1.bf16.msra.mxu0 %v1336
    %1956 = vmatprep.subr.bf16.mxu0 0
    %1957 = vmatpush1.bf16.msra.mxu0 %v1343
    %1958 = vmatprep.mubr.bf16.mxu0 %v232
    %1959 = vmatmul.mubr.bf16.gmra.mrb[0].mxu0 %v231
    %v1960 = vpop.f32.mrb[0].mxu0
    %v1961 = vadd.f32 %v520, %v1960
    %v1962 = vpop.f32.mrb[0].mxu0
    %v1963 = vpop.f32.mrb[0].mxu0
    %v1964 = vpop.f32.mrb[0].mxu0
    %1965 = vdwg.mxu0
    %1966 = vmatprep.subr.bf16.mxu0 0
    %1967 = vmatpush1.bf16.msra.mxu0 %v1350
    %1968 = vmatprep.subr.bf16.mxu0 0
    %1969 = vmatpush1.bf16.msra.mxu0 %v1357
    %1970 = vmatprep.subr.bf16.mxu0 0
    %1971 = vmatpush1.bf16.msra.mxu0 %v1364
    %1972 = vmatprep.subr.bf16.mxu0 0
    %1973 = vmatpush1.bf16.msra.mxu0 %v1371
    %1974 = vmatprep.subr.bf16.mxu0 0
    %1975 = vmatpush1.bf16.msra.mxu0 %v1378
    %1976 = vmatprep.subr.bf16.mxu0 0
    %1977 = vmatpush1.bf16.msra.mxu0 %v1385
    %1978 = vmatprep.subr.bf16.mxu0 0
    %1979 = vmatpush1.bf16.msra.mxu0 %v1392
    %1980 = vmatprep.subr.bf16.mxu0 0
    %1981 = vmatpush1.bf16.msra.mxu0 %v1399
    %1982 = vmatprep.subr.bf16.mxu0 0
    %1983 = vmatpush1.bf16.msra.mxu0 %v1406
    %1984 = vmatprep.subr.bf16.mxu0 0
    %1985 = vmatpush1.bf16.msra.mxu0 %v1413
    %1986 = vmatprep.subr.bf16.mxu0 0
    %1987 = vmatpush1.bf16.msra.mxu0 %v1420
    %1988 = vmatprep.subr.bf16.mxu0 0
    %1989 = vmatpush1.bf16.msra.mxu0 %v1427
    %1990 = vmatprep.subr.bf16.mxu0 0
    %1991 = vmatpush1.bf16.msra.mxu0 %v1434
    %1992 = vmatprep.subr.bf16.mxu0 0
    %1993 = vmatpush1.bf16.msra.mxu0 %v1441
    %1994 = vmatprep.subr.bf16.mxu0 0
    %1995 = vmatpush1.bf16.msra.mxu0 %v1448
    %1996 = vmatprep.subr.bf16.mxu0 0
    %1997 = vmatpush1.bf16.msra.mxu0 %v1455
    %1998 = vmatprep.mubr.bf16.mxu0 %v234
    %1999 = vmatmul.mubr.bf16.gmra.mrb[0].mxu0 %v233
    %v2000 = vpop.f32.mrb[0].mxu0
    %v2001 = vadd.f32 %v1961, %v2000
    %v2002 = vpop.f32.mrb[0].mxu0
    %v2003 = vpop.f32.mrb[0].mxu0
    %v2004 = vpop.f32.mrb[0].mxu0
    %2005 = vdwg.mxu0
    %2006 = vst [vmem:[#allocation2] sm:$0xff] %v1756
    %2007 = vst [vmem:[#allocation2 + $0x8] sm:$0xff] %v1758
    %2008 = vst [vmem:[#allocation2 + $0x10] sm:$0xff] %v1838
    %2009 = vst [vmem:[#allocation2 + $0x18] sm:$0xff] %v1840
    %2010 = vst [vmem:[#allocation2 + $0x20] sm:$0xff] %v1920
    %2011 = vst [vmem:[#allocation2 + $0x28] sm:$0xff] %v1922
    %vm2012 = vcmask 130048
    %2013 = vst.msk [vmem:[#allocation2 + $0x30] sm:$0xff] %vm2012, %v2001
    // Predicated region
    $region22: #{tpu_custom_call.1} parent=1 // pred_check
      _
    $region23: #{tpu_custom_call.1} parent=1 // pred_check_branch
      %2015 = sbr.rel (0) target = $region25
    $region24: #{tpu_custom_call.1} parent=1 // pred_region
      %s2017 = ssub.s32 896, 896
      %2018 = vsyncadd [#allocation3], %s2017
      %s2020 = sshll.u32 [#allocation2], 4
      %s2021 = int_to_ptr.vmem [resolvable:$true] %s2020
      %2023 = dma.vmem_to_hbm [thread:$0]  %s2021, 896, %s5, [#allocation3]
    $region25: #{tpu_custom_call.1} parent=1 // pred_fallthru
      _
    // Predicated region
    $region26: #{tpu_custom_call.1} parent=1 // pred_check
      _
    $region27: #{tpu_custom_call.1} parent=1 // pred_check_branch
      %2025 = sbr.rel (0) target = $region29
    $region28: #{tpu_custom_call.1} parent=1 // pred_region
      %2026 = dma.done [#allocation3], 896
    $region29: #{tpu_custom_call.1} parent=1 // pred_fallthru
      _
    %2027 = vsyncpa [#allocation3], 1

</llo_original>
